<compile_context>
chip_gen: v7x
topology: tpu7x:2x2x1
jax: 0.10.0
libtpu: 0.0.40
codegen_flags: <defaults>
</compile_context>

<pallas_src>
import functools
import inspect

import jax
import jax.numpy as jnp
from jax.experimental import pallas as pl
from jax.experimental.pallas import tpu as pltpu

BLOCK_NUM = 3        # FCBlock(block_num=3)
NEG_SLOPE = 0.2      # LeakyReLU(0.2)
BN_EPS = 1e-5

# Single-buffer the grid-invariant operands (weights/biases never change across the
# grid, so double-buffering them just doubles their VMEM residency).  Guarded so the
# script still runs on JAX versions whose BlockSpec lacks `pipeline_mode`.
_SINGLE_BUF = (
    {"pipeline_mode": pl.Buffered(1)}
    if hasattr(pl, "Buffered")
    and "pipeline_mode" in inspect.signature(pl.BlockSpec).parameters
    else {}
)


def _leaky_relu(x):
    return jnp.where(x > 0, x, NEG_SLOPE * x)


def encoder2d_kernel(x_ref, w1_ref, w2_ref, wf_ref, bpack_ref, bf_ref, o_ref):
    """One (C, tL) activation tile of the full Encoder2D stack.

    x_ref     : (C, tL)   bf16/f32   activation tile (channels=sublanes, tokens=lanes)
    w1_ref    : (BLOCK_NUM, C, C) bf16   BN-folded conv1d-k1 weights, (out, in) layout
    w2_ref    : (BLOCK_NUM, C, C) bf16
    wf_ref    : (C_out, C)        bf16   fc_2 weight
    bpack_ref : (2*BLOCK_NUM, C, 1) f32  folded biases, rows [b1'_0, b2'_0, b1'_1, ...]
    bf_ref    : (C_out, 1)        f32    fc_2 bias
    o_ref     : (C_out, tL)
    """
    h = x_ref[...].astype(jnp.float32)   # residual stream stays f32

    # 3 residual blocks, statically unrolled (block_num is a compile-time const).
    for blk in range(BLOCK_NUM):
        # w1 -> bn1(folded) -> leaky_relu -> (dropout = id in eval)
        y = jnp.dot(w1_ref[blk], h.astype(jnp.bfloat16),
                    preferred_element_type=jnp.float32)
        y = _leaky_relu(y + bpack_ref[2 * blk])
        # w2 -> bn2(folded) -> leaky_relu -> (dropout = id in eval)
        y = jnp.dot(w2_ref[blk], y.astype(jnp.bfloat16),
                    preferred_element_type=jnp.float32)
        y = _leaky_relu(y + bpack_ref[2 * blk + 1])
        # residual
        h = h + y

    # fc_2: Conv1d(linear_size -> channel_out, k=1)
    out = jnp.dot(wf_ref[...], h.astype(jnp.bfloat16),
                  preferred_element_type=jnp.float32) + bf_ref[...]
    o_ref[...] = out.astype(o_ref.dtype)


def _choose_token_tile(L, N, tl_req):
    """128-aligned token tile: <= tl_req, divides L when L is 128-aligned (no ragged
    tail, no pad copy), and if possible leaves >= 2 grid steps so both v7x TCs work."""
    tl_req = max(128, (int(tl_req) // 128) * 128)
    lane_aligned = (L % 128 == 0)
    hi = min(tl_req, pl.cdiv(L, 128) * 128)
    cands = list(range(hi, 0, -128))

    def ok(t, need_two_steps):
        if lane_aligned and L % t != 0:
            return False
        if need_two_steps and N * pl.cdiv(L, t) < 2:
            return False
        return True

    for t in cands:                      # prefer: divides L AND >= 2 total grid steps
        if ok(t, need_two_steps=True):
            return t
    for t in cands:                      # fall back: just divides L (e.g. N=1, L=128)
        if ok(t, need_two_steps=False):
            return t
    return 128


@functools.partial(jax.jit, static_argnames=("tl", "io_dtype"))
def encoder2d_forward(x_ncl, params, tl=1024, io_dtype=jnp.bfloat16):
    """x_ncl: (N, C, L) -> (N, C_out, L) in io_dtype. No wrapper transposes, no pad copy."""
    N, C, L = x_ncl.shape
    w1p, w2p, wfp, bpack, bfp = params
    C_out = wfp.shape[0]

    if x_ncl.dtype != io_dtype:
        # Prefer handing bf16 activations straight in; this cast costs an extra HBM pass.
        x_ncl = x_ncl.astype(io_dtype)

    tl_eff = _choose_token_tile(L, N, tl)
    grid = (N, pl.cdiv(L, tl_eff))   # ragged tail (if any) handled as a partial edge block

    io_bytes = jnp.dtype(io_dtype).itemsize
    weight_bytes = (w1p.size + w2p.size + wfp.size) * 2 + (bpack.size + bfp.size) * 4

    # Advisory cost estimate so XLA can schedule surrounding ops around the call.
    flops = 2 * N * L * C * (2 * BLOCK_NUM * C + C_out)
    bytes_accessed = N * (C + C_out) * L * io_bytes + weight_bytes

    # Explicit VMEM budget (v7x: 64 MiB physical, 32 MiB scoped default).
    vmem_est = (2 * (C + C_out) * tl_eff * io_bytes   # double-buffered activation tiles
                + weight_bytes                        # constants (single-buffered)
                + 8 * C * tl_eff * 4)                 # f32 intermediates headroom
    vmem_limit = int(min(max(2 * vmem_est, 16 << 20), 48 << 20))

    const3 = lambda b, l: (0, 0, 0)
    const2 = lambda b, l: (0, 0)

    out = pl.pallas_call(
        encoder2d_kernel,
        out_shape=jax.ShapeDtypeStruct((N, C_out, L), io_dtype),
        grid_spec=pltpu.PrefetchScalarGridSpec(
            num_scalar_prefetch=0,
            grid=grid,
            in_specs=[
                pl.BlockSpec((None, C, tl_eff), lambda b, l: (b, 0, l)),        # x tile
                pl.BlockSpec((BLOCK_NUM, C, C), const3, **_SINGLE_BUF),         # w1 (folded, bf16)
                pl.BlockSpec((BLOCK_NUM, C, C), const3, **_SINGLE_BUF),         # w2 (folded, bf16)
                pl.BlockSpec((C_out, C), const2, **_SINGLE_BUF),                # fc_2 weight (bf16)
                pl.BlockSpec((2 * BLOCK_NUM, C, 1), const3, **_SINGLE_BUF),     # packed biases
                pl.BlockSpec((C_out, 1), const2, **_SINGLE_BUF),                # fc_2 bias
            ],
            out_specs=pl.BlockSpec((None, C_out, tl_eff), lambda b, l: (b, 0, l)),
        ),
        compiler_params=pltpu.CompilerParams(
            dimension_semantics=("parallel", "parallel"),
            vmem_limit_bytes=vmem_limit),
        cost_estimate=pl.CostEstimate(
            flops=flops, transcendentals=0, bytes_accessed=bytes_accessed),
    )(x_ncl, w1p, w2p, wfp, bpack, bfp)
    return out


# ---------------------------------------------------------------------------
# Parameters
# ---------------------------------------------------------------------------

def init_raw_params(key, channel, channel_out=None):
    """Deterministic synthetic parameters matching the PyTorch module's shapes."""
    C = channel
    C_out = C if channel_out is None else channel_out
    keys = jax.random.split(key, 3)

    def conv_w(k, co, ci):  # Conv1d weight, native (out_ch, in_ch) layout
        return jax.random.normal(k, (co, ci), jnp.float32) / jnp.sqrt(ci)

    cols = {n: [] for n in ("w1", "b1", "g1", "be1", "m1", "v1",
                            "w2", "b2", "g2", "be2", "m2", "v2")}
    for blk in range(BLOCK_NUM):
        k = jax.random.split(jax.random.fold_in(keys[0], blk), 12)
        cols["w1"].append(conv_w(k[0], C, C))
        cols["b1"].append(0.05 * jax.random.normal(k[1], (C,), jnp.float32))
        cols["g1"].append(1.0 + 0.1 * jax.random.normal(k[2], (C,), jnp.float32))
        cols["be1"].append(0.1 * jax.random.normal(k[3], (C,), jnp.float32))
        cols["m1"].append(0.1 * jax.random.normal(k[4], (C,), jnp.float32))
        cols["v1"].append(jnp.abs(jax.random.normal(k[5], (C,), jnp.float32)) + 0.5)
        cols["w2"].append(conv_w(k[6], C, C))
        cols["b2"].append(0.05 * jax.random.normal(k[7], (C,), jnp.float32))
        cols["g2"].append(1.0 + 0.1 * jax.random.normal(k[8], (C,), jnp.float32))
        cols["be2"].append(0.1 * jax.random.normal(k[9], (C,), jnp.float32))
        cols["m2"].append(0.1 * jax.random.normal(k[10], (C,), jnp.float32))
        cols["v2"].append(jnp.abs(jax.random.normal(k[11], (C,), jnp.float32)) + 0.5)

    raw = {name: jnp.stack(vals, axis=0) for name, vals in cols.items()}
    raw["wf"] = conv_w(keys[1], C_out, C)
    raw["bf"] = 0.05 * jax.random.normal(keys[2], (C_out,), jnp.float32)
    return raw


def fold_params(raw):
    """Fold eval-mode BatchNorm into the conv weights/biases; cast MXU operands to bf16."""
    s1 = raw["g1"] / jnp.sqrt(raw["v1"] + BN_EPS)                    # (B, C)
    s2 = raw["g2"] / jnp.sqrt(raw["v2"] + BN_EPS)
    w1p = (raw["w1"] * s1[:, :, None]).astype(jnp.bfloat16)          # scale out-channel rows
    w2p = (raw["w2"] * s2[:, :, None]).astype(jnp.bfloat16)
    b1p = s1 * (raw["b1"] - raw["m1"]) + raw["be1"]                  # (B, C)
    b2p = s2 * (raw["b2"] - raw["m2"]) + raw["be2"]
    # interleave per-block biases: rows [b1'_0, b2'_0, b1'_1, b2'_1, ...], shape (2B, C, 1)
    bpack = jnp.stack([b1p, b2p], axis=1).reshape(2 * BLOCK_NUM, -1)[:, :, None]
    wfp = raw["wf"].astype(jnp.bfloat16)
    bfp = raw["bf"][:, None]
    return (w1p, w2p, wfp, bpack.astype(jnp.float32), bfp.astype(jnp.float32))


# ---------------------------------------------------------------------------
# Pure-JAX f32 reference (same eval-mode semantics as the PyTorch module)
# ---------------------------------------------------------------------------

def reference_forward(x_ncl, raw):
    def bn(y, g, be, m, v):
        s = g / jnp.sqrt(v + BN_EPS)
        return (y - m[None, :, None]) * s[None, :, None] + be[None, :, None]

    h = x_ncl
    for blk in range(BLOCK_NUM):
        y = jnp.einsum("oc,ncl->nol", raw["w1"][blk], h) + raw["b1"][blk][None, :, None]
        y = _leaky_relu(bn(y, raw["g1"][blk], raw["be1"][blk], raw["m1"][blk], raw["v1"][blk]))
        y = jnp.einsum("oc,ncl->nol", raw["w2"][blk], y) + raw["b2"][blk][None, :, None]
        y = _leaky_relu(bn(y, raw["g2"][blk], raw["be2"][blk], raw["m2"][blk], raw["v2"][blk]))
        h = h + y
    return jnp.einsum("oc,ncl->nol", raw["wf"], h) + raw["bf"][None, :, None]


if __name__ == "__main__":
    key = jax.random.PRNGKey(0)
    k_x, k_p = jax.random.split(key)

    N, C, L = 2, 32, 512          # args.channel = 32; input is (N, channel, seq)
    x_f32 = jax.random.normal(k_x, (N, C, L), jnp.float32)
    x_bf16 = x_f32.astype(jnp.bfloat16)          # bf16 activations in HBM (halves x/out streams)
    raw = init_raw_params(k_p, C)
    params = fold_params(raw)

    out = encoder2d_forward(x_bf16, params)      # default tl=1024, clamped/derived from L, N
    out = jax.block_until_ready(out)

    # Reference sees the same (bf16-quantized) input so the comparison isolates the
    # kernel's bf16 matmul path + bf16 output store against pure-f32 math.
    ref = reference_forward(x_bf16.astype(jnp.float32), raw)
    assert out.shape == (N, C, L), out.shape
    out_f32 = out.astype(jnp.float32)
    max_err = float(jnp.max(jnp.abs(out_f32 - ref)))
    rel_err = float(jnp.linalg.norm(out_f32 - ref) / jnp.linalg.norm(ref))
    assert max_err < 3e-1 and rel_err < 3e-2, (max_err, rel_err)

    print("KERNEL_OK")
</pallas_src>

<mosaic_0001>
module attributes {stable_mosaic.version = 11 : i64} {
  func.func @encoder2d_kernel(%arg0: i32, %arg1: i32, %arg2: memref<1x32x512xbf16, #tpu.memory_space<vmem>>, %arg3: memref<3x32x32xbf16, #tpu.memory_space<vmem>>, %arg4: memref<3x32x32xbf16, #tpu.memory_space<vmem>>, %arg5: memref<32x32xbf16, #tpu.memory_space<vmem>>, %arg6: memref<6x32x1xf32, #tpu.memory_space<vmem>>, %arg7: memref<32x1xf32, #tpu.memory_space<vmem>>, %arg8: memref<1x32x512xbf16, #tpu.memory_space<vmem>>) attributes {dimension_semantics = [#tpu.dimension_semantics<parallel>, #tpu.dimension_semantics<parallel>], iteration_bounds = array<i64: 2, 1>, scalar_prefetch = 0 : i64, scratch_operands = 0 : i64, tpu.core_type = #tpu.core_type<tc>, window_params = [{transform_indices = @transform_0, window_bounds = array<i64: 1, 32, 512>}, {pipeline_mode = #tpu.pipeline_mode<synchronous>, transform_indices = @transform_1, window_bounds = array<i64: 3, 32, 32>}, {pipeline_mode = #tpu.pipeline_mode<synchronous>, transform_indices = @transform_2, window_bounds = array<i64: 3, 32, 32>}, {pipeline_mode = #tpu.pipeline_mode<synchronous>, transform_indices = @transform_3, window_bounds = array<i64: 32, 32>}, {pipeline_mode = #tpu.pipeline_mode<synchronous>, transform_indices = @transform_4, window_bounds = array<i64: 6, 32, 1>}, {pipeline_mode = #tpu.pipeline_mode<synchronous>, transform_indices = @transform_5, window_bounds = array<i64: 32, 1>}, {transform_indices = @transform_6, window_bounds = array<i64: 1, 32, 512>}]} {
    %c0 = arith.constant 0 : index
    %c0_0 = arith.constant 0 : index
    %c0_1 = arith.constant 0 : index
    %0 = vector.load %arg2[%c0, %c0_0, %c0_1] : memref<1x32x512xbf16, #tpu.memory_space<vmem>>, vector<1x32x512xbf16>
    %1 = vector.shape_cast %0 : vector<1x32x512xbf16> to vector<32x512xbf16>
    %2 = arith.extf %1 : vector<32x512xbf16> to vector<32x512xf32>
    %c0_2 = arith.constant 0 : index
    %c0_3 = arith.constant 0 : index
    %c0_4 = arith.constant 0 : index
    %3 = vector.load %arg3[%c0_2, %c0_3, %c0_4] : memref<3x32x32xbf16, #tpu.memory_space<vmem>>, vector<1x32x32xbf16>
    %4 = vector.shape_cast %3 : vector<1x32x32xbf16> to vector<32x32xbf16>
    %5 = arith.truncf %2 : vector<32x512xf32> to vector<32x512xbf16>
    %cst = arith.constant dense<0.000000e+00> : vector<32x512xf32>
    %6 = tpu.matmul %4, %5, %cst {dimension_numbers = #tpu.dot_dimension_numbers<[1], [0], [0], [1], [0, 0, 1, 1], [], []>} : vector<32x32xbf16>, vector<32x512xbf16>, vector<32x512xf32> -> vector<32x512xf32>
    %c0_5 = arith.constant 0 : index
    %c0_6 = arith.constant 0 : index
    %c0_7 = arith.constant 0 : index
    %7 = vector.load %arg6[%c0_5, %c0_6, %c0_7] : memref<6x32x1xf32, #tpu.memory_space<vmem>>, vector<1x32x1xf32>
    %8 = vector.shape_cast %7 : vector<1x32x1xf32> to vector<32x1xf32>
    %9 = vector.broadcast %8 : vector<32x1xf32> to vector<32x512xf32>
    %10 = arith.addf %6, %9 : vector<32x512xf32>
    %cst_8 = arith.constant 0.000000e+00 : f32
    %11 = vector.broadcast %cst_8 : f32 to vector<32x512xf32>
    %12 = arith.cmpf ogt, %10, %11 : vector<32x512xf32>
    %cst_9 = arith.constant 2.000000e-01 : f32
    %13 = vector.broadcast %cst_9 : f32 to vector<32x512xf32>
    %14 = arith.mulf %13, %10 : vector<32x512xf32>
    %15 = arith.select %12, %10, %14 : vector<32x512xi1>, vector<32x512xf32>
    %c0_10 = arith.constant 0 : index
    %c0_11 = arith.constant 0 : index
    %c0_12 = arith.constant 0 : index
    %16 = vector.load %arg4[%c0_10, %c0_11, %c0_12] : memref<3x32x32xbf16, #tpu.memory_space<vmem>>, vector<1x32x32xbf16>
    %17 = vector.shape_cast %16 : vector<1x32x32xbf16> to vector<32x32xbf16>
    %18 = arith.truncf %15 : vector<32x512xf32> to vector<32x512xbf16>
    %cst_13 = arith.constant dense<0.000000e+00> : vector<32x512xf32>
    %19 = tpu.matmul %17, %18, %cst_13 {dimension_numbers = #tpu.dot_dimension_numbers<[1], [0], [0], [1], [0, 0, 1, 1], [], []>} : vector<32x32xbf16>, vector<32x512xbf16>, vector<32x512xf32> -> vector<32x512xf32>
    %c1 = arith.constant 1 : index
    %c0_14 = arith.constant 0 : index
    %c0_15 = arith.constant 0 : index
    %20 = vector.load %arg6[%c1, %c0_14, %c0_15] : memref<6x32x1xf32, #tpu.memory_space<vmem>>, vector<1x32x1xf32>
    %21 = vector.shape_cast %20 : vector<1x32x1xf32> to vector<32x1xf32>
    %22 = vector.broadcast %21 : vector<32x1xf32> to vector<32x512xf32>
    %23 = arith.addf %19, %22 : vector<32x512xf32>
    %cst_16 = arith.constant 0.000000e+00 : f32
    %24 = vector.broadcast %cst_16 : f32 to vector<32x512xf32>
    %25 = arith.cmpf ogt, %23, %24 : vector<32x512xf32>
    %cst_17 = arith.constant 2.000000e-01 : f32
    %26 = vector.broadcast %cst_17 : f32 to vector<32x512xf32>
    %27 = arith.mulf %26, %23 : vector<32x512xf32>
    %28 = arith.select %25, %23, %27 : vector<32x512xi1>, vector<32x512xf32>
    %29 = arith.addf %2, %28 : vector<32x512xf32>
    %c1_18 = arith.constant 1 : index
    %c0_19 = arith.constant 0 : index
    %c0_20 = arith.constant 0 : index
    %30 = vector.load %arg3[%c1_18, %c0_19, %c0_20] : memref<3x32x32xbf16, #tpu.memory_space<vmem>>, vector<1x32x32xbf16>
    %31 = vector.shape_cast %30 : vector<1x32x32xbf16> to vector<32x32xbf16>
    %32 = arith.truncf %29 : vector<32x512xf32> to vector<32x512xbf16>
    %cst_21 = arith.constant dense<0.000000e+00> : vector<32x512xf32>
    %33 = tpu.matmul %31, %32, %cst_21 {dimension_numbers = #tpu.dot_dimension_numbers<[1], [0], [0], [1], [0, 0, 1, 1], [], []>} : vector<32x32xbf16>, vector<32x512xbf16>, vector<32x512xf32> -> vector<32x512xf32>
    %c2 = arith.constant 2 : index
    %c0_22 = arith.constant 0 : index
    %c0_23 = arith.constant 0 : index
    %34 = vector.load %arg6[%c2, %c0_22, %c0_23] : memref<6x32x1xf32, #tpu.memory_space<vmem>>, vector<1x32x1xf32>
    %35 = vector.shape_cast %34 : vector<1x32x1xf32> to vector<32x1xf32>
    %36 = vector.broadcast %35 : vector<32x1xf32> to vector<32x512xf32>
    %37 = arith.addf %33, %36 : vector<32x512xf32>
    %cst_24 = arith.constant 0.000000e+00 : f32
    %38 = vector.broadcast %cst_24 : f32 to vector<32x512xf32>
    %39 = arith.cmpf ogt, %37, %38 : vector<32x512xf32>
    %cst_25 = arith.constant 2.000000e-01 : f32
    %40 = vector.broadcast %cst_25 : f32 to vector<32x512xf32>
    %41 = arith.mulf %40, %37 : vector<32x512xf32>
    %42 = arith.select %39, %37, %41 : vector<32x512xi1>, vector<32x512xf32>
    %c1_26 = arith.constant 1 : index
    %c0_27 = arith.constant 0 : index
    %c0_28 = arith.constant 0 : index
    %43 = vector.load %arg4[%c1_26, %c0_27, %c0_28] : memref<3x32x32xbf16, #tpu.memory_space<vmem>>, vector<1x32x32xbf16>
    %44 = vector.shape_cast %43 : vector<1x32x32xbf16> to vector<32x32xbf16>
    %45 = arith.truncf %42 : vector<32x512xf32> to vector<32x512xbf16>
    %cst_29 = arith.constant dense<0.000000e+00> : vector<32x512xf32>
    %46 = tpu.matmul %44, %45, %cst_29 {dimension_numbers = #tpu.dot_dimension_numbers<[1], [0], [0], [1], [0, 0, 1, 1], [], []>} : vector<32x32xbf16>, vector<32x512xbf16>, vector<32x512xf32> -> vector<32x512xf32>
    %c3 = arith.constant 3 : index
    %c0_30 = arith.constant 0 : index
    %c0_31 = arith.constant 0 : index
    %47 = vector.load %arg6[%c3, %c0_30, %c0_31] : memref<6x32x1xf32, #tpu.memory_space<vmem>>, vector<1x32x1xf32>
    %48 = vector.shape_cast %47 : vector<1x32x1xf32> to vector<32x1xf32>
    %49 = vector.broadcast %48 : vector<32x1xf32> to vector<32x512xf32>
    %50 = arith.addf %46, %49 : vector<32x512xf32>
    %cst_32 = arith.constant 0.000000e+00 : f32
    %51 = vector.broadcast %cst_32 : f32 to vector<32x512xf32>
    %52 = arith.cmpf ogt, %50, %51 : vector<32x512xf32>
    %cst_33 = arith.constant 2.000000e-01 : f32
    %53 = vector.broadcast %cst_33 : f32 to vector<32x512xf32>
    %54 = arith.mulf %53, %50 : vector<32x512xf32>
    %55 = arith.select %52, %50, %54 : vector<32x512xi1>, vector<32x512xf32>
    %56 = arith.addf %29, %55 : vector<32x512xf32>
    %c2_34 = arith.constant 2 : index
    %c0_35 = arith.constant 0 : index
    %c0_36 = arith.constant 0 : index
    %57 = vector.load %arg3[%c2_34, %c0_35, %c0_36] : memref<3x32x32xbf16, #tpu.memory_space<vmem>>, vector<1x32x32xbf16>
    %58 = vector.shape_cast %57 : vector<1x32x32xbf16> to vector<32x32xbf16>
    %59 = arith.truncf %56 : vector<32x512xf32> to vector<32x512xbf16>
    %cst_37 = arith.constant dense<0.000000e+00> : vector<32x512xf32>
    %60 = tpu.matmul %58, %59, %cst_37 {dimension_numbers = #tpu.dot_dimension_numbers<[1], [0], [0], [1], [0, 0, 1, 1], [], []>} : vector<32x32xbf16>, vector<32x512xbf16>, vector<32x512xf32> -> vector<32x512xf32>
    %c4 = arith.constant 4 : index
    %c0_38 = arith.constant 0 : index
    %c0_39 = arith.constant 0 : index
    %61 = vector.load %arg6[%c4, %c0_38, %c0_39] : memref<6x32x1xf32, #tpu.memory_space<vmem>>, vector<1x32x1xf32>
    %62 = vector.shape_cast %61 : vector<1x32x1xf32> to vector<32x1xf32>
    %63 = vector.broadcast %62 : vector<32x1xf32> to vector<32x512xf32>
    %64 = arith.addf %60, %63 : vector<32x512xf32>
    %cst_40 = arith.constant 0.000000e+00 : f32
    %65 = vector.broadcast %cst_40 : f32 to vector<32x512xf32>
    %66 = arith.cmpf ogt, %64, %65 : vector<32x512xf32>
    %cst_41 = arith.constant 2.000000e-01 : f32
    %67 = vector.broadcast %cst_41 : f32 to vector<32x512xf32>
    %68 = arith.mulf %67, %64 : vector<32x512xf32>
    %69 = arith.select %66, %64, %68 : vector<32x512xi1>, vector<32x512xf32>
    %c2_42 = arith.constant 2 : index
    %c0_43 = arith.constant 0 : index
    %c0_44 = arith.constant 0 : index
    %70 = vector.load %arg4[%c2_42, %c0_43, %c0_44] : memref<3x32x32xbf16, #tpu.memory_space<vmem>>, vector<1x32x32xbf16>
    %71 = vector.shape_cast %70 : vector<1x32x32xbf16> to vector<32x32xbf16>
    %72 = arith.truncf %69 : vector<32x512xf32> to vector<32x512xbf16>
    %cst_45 = arith.constant dense<0.000000e+00> : vector<32x512xf32>
    %73 = tpu.matmul %71, %72, %cst_45 {dimension_numbers = #tpu.dot_dimension_numbers<[1], [0], [0], [1], [0, 0, 1, 1], [], []>} : vector<32x32xbf16>, vector<32x512xbf16>, vector<32x512xf32> -> vector<32x512xf32>
    %c5 = arith.constant 5 : index
    %c0_46 = arith.constant 0 : index
    %c0_47 = arith.constant 0 : index
    %74 = vector.load %arg6[%c5, %c0_46, %c0_47] : memref<6x32x1xf32, #tpu.memory_space<vmem>>, vector<1x32x1xf32>
    %75 = vector.shape_cast %74 : vector<1x32x1xf32> to vector<32x1xf32>
    %76 = vector.broadcast %75 : vector<32x1xf32> to vector<32x512xf32>
    %77 = arith.addf %73, %76 : vector<32x512xf32>
    %cst_48 = arith.constant 0.000000e+00 : f32
    %78 = vector.broadcast %cst_48 : f32 to vector<32x512xf32>
    %79 = arith.cmpf ogt, %77, %78 : vector<32x512xf32>
    %cst_49 = arith.constant 2.000000e-01 : f32
    %80 = vector.broadcast %cst_49 : f32 to vector<32x512xf32>
    %81 = arith.mulf %80, %77 : vector<32x512xf32>
    %82 = arith.select %79, %77, %81 : vector<32x512xi1>, vector<32x512xf32>
    %83 = arith.addf %56, %82 : vector<32x512xf32>
    %c0_50 = arith.constant 0 : index
    %c0_51 = arith.constant 0 : index
    %84 = vector.load %arg5[%c0_50, %c0_51] : memref<32x32xbf16, #tpu.memory_space<vmem>>, vector<32x32xbf16>
    %85 = arith.truncf %83 : vector<32x512xf32> to vector<32x512xbf16>
    %cst_52 = arith.constant dense<0.000000e+00> : vector<32x512xf32>
    %86 = tpu.matmul %84, %85, %cst_52 {dimension_numbers = #tpu.dot_dimension_numbers<[1], [0], [0], [1], [0, 0, 1, 1], [], []>} : vector<32x32xbf16>, vector<32x512xbf16>, vector<32x512xf32> -> vector<32x512xf32>
    %c0_53 = arith.constant 0 : index
    %c0_54 = arith.constant 0 : index
    %87 = vector.load %arg7[%c0_53, %c0_54] : memref<32x1xf32, #tpu.memory_space<vmem>>, vector<32x1xf32>
    %88 = vector.broadcast %87 : vector<32x1xf32> to vector<32x512xf32>
    %89 = arith.addf %86, %88 : vector<32x512xf32>
    %90 = arith.truncf %89 : vector<32x512xf32> to vector<32x512xbf16>
    %c0_55 = arith.constant 0 : index
    %c0_56 = arith.constant 0 : index
    %c0_57 = arith.constant 0 : index
    %91 = vector.load %arg8[%c0_55, %c0_56, %c0_57] : memref<1x32x512xbf16, #tpu.memory_space<vmem>>, vector<1x32x512xbf16>
    %92 = vector.shape_cast %91 : vector<1x32x512xbf16> to vector<32x512xbf16>
    %93 = vector.shape_cast %90 : vector<32x512xbf16> to vector<1x32x512xbf16>
    tpu.vector_store %arg8[%c0_55, %c0_56, %c0_57], %93 {strides = array<i32>} : memref<1x32x512xbf16, #tpu.memory_space<vmem>>, vector<1x32x512xbf16>,
    return
  }
  func.func @transform_0(%arg0: i32, %arg1: i32) -> (i32, i32, i32) {
    %c0_i32 = arith.constant 0 : i32
    %c0_i32_0 = arith.constant 0 : i32
    return %arg0, %c0_i32, %arg1 : i32, i32, i32
  }
  func.func @transform_1(%arg0: i32, %arg1: i32) -> (i32, i32, i32) {
    %c0_i32 = arith.constant 0 : i32
    %c0_i32_0 = arith.constant 0 : i32
    %c0_i32_1 = arith.constant 0 : i32
    %c0_i32_2 = arith.constant 0 : i32
    return %c0_i32, %c0_i32_0, %c0_i32_1 : i32, i32, i32
  }
  func.func @transform_2(%arg0: i32, %arg1: i32) -> (i32, i32, i32) {
    %c0_i32 = arith.constant 0 : i32
    %c0_i32_0 = arith.constant 0 : i32
    %c0_i32_1 = arith.constant 0 : i32
    %c0_i32_2 = arith.constant 0 : i32
    return %c0_i32, %c0_i32_0, %c0_i32_1 : i32, i32, i32
  }
  func.func @transform_3(%arg0: i32, %arg1: i32) -> (i32, i32) {
    %c0_i32 = arith.constant 0 : i32
    %c0_i32_0 = arith.constant 0 : i32
    %c0_i32_1 = arith.constant 0 : i32
    return %c0_i32, %c0_i32_0 : i32, i32
  }
  func.func @transform_4(%arg0: i32, %arg1: i32) -> (i32, i32, i32) {
    %c0_i32 = arith.constant 0 : i32
    %c0_i32_0 = arith.constant 0 : i32
    %c0_i32_1 = arith.constant 0 : i32
    %c0_i32_2 = arith.constant 0 : i32
    return %c0_i32, %c0_i32_0, %c0_i32_1 : i32, i32, i32
  }
  func.func @transform_5(%arg0: i32, %arg1: i32) -> (i32, i32) {
    %c0_i32 = arith.constant 0 : i32
    %c0_i32_0 = arith.constant 0 : i32
    %c0_i32_1 = arith.constant 0 : i32
    return %c0_i32, %c0_i32_0 : i32, i32
  }
  func.func @transform_6(%arg0: i32, %arg1: i32) -> (i32, i32, i32) {
    %c0_i32 = arith.constant 0 : i32
    %c0_i32_0 = arith.constant 0 : i32
    return %arg0, %c0_i32, %arg1 : i32, i32, i32
  }
}

</mosaic_0001>

<llo_original>
// kernel: encoder2d_forward.1
$region0: #{encoder2d_forward.1}
  #allocation0 [shape = 'u32[]', space=smem, size = 0x4, offset = 0x4, fixed_abs, tag = 'smem constant byte address 0x4 - core index']
  #allocation1 [shape = 'u32[144,128]{1,0:T(1,128)}', space=vmem, size = 0x12000, scoped, tag = 'internal scratch']
  %s0 = inlined_call_operand.vmem [shape: bf16[2,32,512], index: 0, kind: input, shape index: {}]
  %s1 = inlined_call_operand.vmem [shape: bf16[3,32,32], index: 1, kind: input, shape index: {}]
  %s2 = inlined_call_operand.vmem [shape: bf16[3,32,32], index: 2, kind: input, shape index: {}]
  %s3 = inlined_call_operand.vmem [shape: bf16[32,32], index: 3, kind: input, shape index: {}]
  %s4 = inlined_call_operand.vmem [shape: f32[6,32,1], index: 4, kind: input, shape index: {}]
  %s5 = inlined_call_operand.vmem [shape: f32[32,1], index: 5, kind: input, shape index: {}]
  %s6 = inlined_call_operand.hbm [shape: bf16[2,32,512], index: 6, kind: output, shape index: {}]
  %s7 = sld [smem:[#allocation0]]
  $region57: #{encoder2d_forward.1} parent=0
    _
  %s9 = ssub.s32 1, %s7
  %s10 = scalar_select 0, %s9, %s7
  $region1: #{encoder2d_forward.1} parent=0
    #allocation2 [shape = 'u8[65536]{0}', space=vmem, size = 0x10000, scoped, tag = 'output window, operand 0']
    #allocation3 [shape = 's32[2]{0}', space=sflag, size = 0x8, scoped, tag = 'scoped memory for encoder2d_forward.1']
    %11 = vsyncpa [#allocation3], 0
    %s12 = scalar_lea.sflag [#allocation3], 1
    %13 = vsyncpa %s12, 0
    loop: start=0, step=1, limit=4
    $region2: #{encoder2d_forward.1} parent=1 // loop_pre_header
      _
    $region3: #{encoder2d_forward.1} parent=1 // loop_header
      %s15 = sphi 0, %s19
      %p16 = scmp.ge.s32.totalorder %s15, 4
      %s22 = sphi 0, %s34
      %s23 = sphi 0, %s30
      %s24 = sphi 0, %s22
      %s25 = sphi 0, %s23
      %s26 = sphi 0, %s24
      %s27 = sphi 0, %s25
      %s39 = sphi 0, %s41
      %s42 = sphi 0, %s39
      %s43 = sphi 0, %s42
      %s59 = sphi 0, %s43
      %s63 = sphi 0, %s63
      %s65 = sphi 0, %s63
      %s66 = sphi 0, %s65
      %s80 = sphi 0, %s66
      %s84 = sphi 0, %s84
      %s86 = sphi 0, %s84
      %s87 = sphi 0, %s86
      %s101 = sphi 0, %s87
      %s105 = sphi 0, %s105
      %s107 = sphi 0, %s105
      %s108 = sphi 0, %s107
      %s122 = sphi 0, %s108
      %s126 = sphi 0, %s126
      %s128 = sphi 0, %s126
      %s129 = sphi 0, %s128
      %s143 = sphi 0, %s129
      %s147 = sphi 0, %s147
      %s149 = sphi 0, %s147
      %s150 = sphi 0, %s149
      %s164 = sphi 0, %s150
      %s172 = sphi 0, %s174
      %s175 = sphi 0, %s172
      %s176 = sphi 0, %s175
      %s192 = sphi 0, %s176
    $region4: #{encoder2d_forward.1} parent=1 // loop_header_branch
      %18 = sbr.rel (%p16) target = $region8
    $region5: #{encoder2d_forward.1} parent=1 // loop_body
      %s20 = ssub.s32 %s15, 1
      %s21 = ssub.s32 %s15, 2
      %s28 = sadd.s32 1, %s23
      %p29 = scmp.ge.s32.totalorder %s28, 1
      %s30 = scalar_select %p29, 0, %s28
      %s31 = sadd.s32 1, %s22
      %s32 = scalar_select %p29, %s31, %s22
      %p33 = scmp.ge.s32.totalorder %s32, 2
      %s34 = scalar_select %p33, 0, %s32
      %s35 = ssub.s32 %s22, %s34
      %s36 = ssub.s32 %s23, %s30
      %s37 = sor.u32 %s35, %s36
      %p38 = scmp.eq.s32.totalorder %s37, 0
      %s40 = sadd.s32 %s39, 1
      %s41 = scalar_select %p38, %s39, %s40
      %p44 = pneg %p38
      %p45 = scmp.eq.s32.totalorder %s15, 1
      %p46 = por %p44, %p45
      %p47 = scmp.ne.s32.totalorder %s39, %s42
      %p48 = scmp.eq.s32.totalorder %s15, 0
      %p49 = por %p47, %p48
      %p50 = scmp.ne.s32.totalorder %s39, %s42
      %p51 = scmp.eq.s32.totalorder %s20, 1
      %p52 = por %p50, %p51
      %p53 = scmp.ne.s32.totalorder %s42, %s43
      %p54 = scmp.eq.s32.totalorder %s20, 0
      %p55 = por %p53, %p54
      %p56 = scmp.ne.s32.totalorder %s42, %s43
      %p57 = scmp.eq.s32.totalorder %s21, 1
      %p58 = por %p56, %p57
      %p60 = scmp.ne.s32.totalorder %s43, %s59
      %p61 = scmp.eq.s32.totalorder %s21, 0
      %p62 = por %p60, %p61
      %s64 = sadd.s32 %s63, 1
      %p67 = scmp.eq.s32.totalorder %s15, 1
      %p68 = scmp.ne.s32.totalorder %s63, %s65
      %p69 = scmp.eq.s32.totalorder %s15, 0
      %p70 = por %p68, %p69
      %p71 = scmp.ne.s32.totalorder %s63, %s65
      %p72 = scmp.eq.s32.totalorder %s20, 1
      %p73 = por %p71, %p72
      %p74 = scmp.ne.s32.totalorder %s65, %s66
      %p75 = scmp.eq.s32.totalorder %s20, 0
      %p76 = por %p74, %p75
      %p77 = scmp.ne.s32.totalorder %s65, %s66
      %p78 = scmp.eq.s32.totalorder %s21, 1
      %p79 = por %p77, %p78
      %p81 = scmp.ne.s32.totalorder %s66, %s80
      %p82 = scmp.eq.s32.totalorder %s21, 0
      %p83 = por %p81, %p82
      %s85 = sadd.s32 %s84, 1
      %p88 = scmp.eq.s32.totalorder %s15, 1
      %p89 = scmp.ne.s32.totalorder %s84, %s86
      %p90 = scmp.eq.s32.totalorder %s15, 0
      %p91 = por %p89, %p90
      %p92 = scmp.ne.s32.totalorder %s84, %s86
      %p93 = scmp.eq.s32.totalorder %s20, 1
      %p94 = por %p92, %p93
      %p95 = scmp.ne.s32.totalorder %s86, %s87
      %p96 = scmp.eq.s32.totalorder %s20, 0
      %p97 = por %p95, %p96
      %p98 = scmp.ne.s32.totalorder %s86, %s87
      %p99 = scmp.eq.s32.totalorder %s21, 1
      %p100 = por %p98, %p99
      %p102 = scmp.ne.s32.totalorder %s87, %s101
      %p103 = scmp.eq.s32.totalorder %s21, 0
      %p104 = por %p102, %p103
      %s106 = sadd.s32 %s105, 1
      %p109 = scmp.eq.s32.totalorder %s15, 1
      %p110 = scmp.ne.s32.totalorder %s105, %s107
      %p111 = scmp.eq.s32.totalorder %s15, 0
      %p112 = por %p110, %p111
      %p113 = scmp.ne.s32.totalorder %s105, %s107
      %p114 = scmp.eq.s32.totalorder %s20, 1
      %p115 = por %p113, %p114
      %p116 = scmp.ne.s32.totalorder %s107, %s108
      %p117 = scmp.eq.s32.totalorder %s20, 0
      %p118 = por %p116, %p117
      %p119 = scmp.ne.s32.totalorder %s107, %s108
      %p120 = scmp.eq.s32.totalorder %s21, 1
      %p121 = por %p119, %p120
      %p123 = scmp.ne.s32.totalorder %s108, %s122
      %p124 = scmp.eq.s32.totalorder %s21, 0
      %p125 = por %p123, %p124
      %s127 = sadd.s32 %s126, 1
      %p130 = scmp.eq.s32.totalorder %s15, 1
      %p131 = scmp.ne.s32.totalorder %s126, %s128
      %p132 = scmp.eq.s32.totalorder %s15, 0
      %p133 = por %p131, %p132
      %p134 = scmp.ne.s32.totalorder %s126, %s128
      %p135 = scmp.eq.s32.totalorder %s20, 1
      %p136 = por %p134, %p135
      %p137 = scmp.ne.s32.totalorder %s128, %s129
      %p138 = scmp.eq.s32.totalorder %s20, 0
      %p139 = por %p137, %p138
      %p140 = scmp.ne.s32.totalorder %s128, %s129
      %p141 = scmp.eq.s32.totalorder %s21, 1
      %p142 = por %p140, %p141
      %p144 = scmp.ne.s32.totalorder %s129, %s143
      %p145 = scmp.eq.s32.totalorder %s21, 0
      %p146 = por %p144, %p145
      %s148 = sadd.s32 %s147, 1
      %p151 = scmp.eq.s32.totalorder %s15, 1
      %p152 = scmp.ne.s32.totalorder %s147, %s149
      %p153 = scmp.eq.s32.totalorder %s15, 0
      %p154 = por %p152, %p153
      %p155 = scmp.ne.s32.totalorder %s147, %s149
      %p156 = scmp.eq.s32.totalorder %s20, 1
      %p157 = por %p155, %p156
      %p158 = scmp.ne.s32.totalorder %s149, %s150
      %p159 = scmp.eq.s32.totalorder %s20, 0
      %p160 = por %p158, %p159
      %p161 = scmp.ne.s32.totalorder %s149, %s150
      %p162 = scmp.eq.s32.totalorder %s21, 1
      %p163 = por %p161, %p162
      %p165 = scmp.ne.s32.totalorder %s150, %s164
      %p166 = scmp.eq.s32.totalorder %s21, 0
      %p167 = por %p165, %p166
      %s168 = ssub.s32 %s22, %s34
      %s169 = ssub.s32 %s23, %s30
      %s170 = sor.u32 %s168, %s169
      %p171 = scmp.eq.s32.totalorder %s170, 0
      %s173 = sadd.s32 %s172, 1
      %s174 = scalar_select %p171, %s172, %s173
      %p177 = pneg %p171
      %p178 = scmp.eq.s32.totalorder %s15, 1
      %p179 = por %p177, %p178
      %p180 = scmp.ne.s32.totalorder %s172, %s175
      %p181 = scmp.eq.s32.totalorder %s15, 0
      %p182 = por %p180, %p181
      %p183 = scmp.ne.s32.totalorder %s172, %s175
      %p184 = scmp.eq.s32.totalorder %s20, 1
      %p185 = por %p183, %p184
      %p186 = scmp.ne.s32.totalorder %s175, %s176
      %p187 = scmp.eq.s32.totalorder %s20, 0
      %p188 = por %p186, %p187
      %p189 = scmp.ne.s32.totalorder %s175, %s176
      %p190 = scmp.eq.s32.totalorder %s21, 1
      %p191 = por %p189, %p190
      %p193 = scmp.ne.s32.totalorder %s176, %s192
      %p194 = scmp.eq.s32.totalorder %s21, 0
      %p195 = por %p193, %p194
      %p196 = scmp.le.s32.totalorder 1, %s15
      %p197 = scmp.lt.s32.totalorder %s15, 3
      %p198 = pnand %p196, %p197
      %p199 = pneg %p198
      // Predicated region
      $region9: #{encoder2d_forward.1} parent=5 // pred_check
        _
      $region10: #{encoder2d_forward.1} parent=5 // pred_check_branch
        %201 = sbr.rel (%p198) target = $region12
      $region11: #{encoder2d_forward.1} parent=5 // pred_region
        %s202 = ssub.s32 %s15, 1
        // Predicated region
        $region13: #{encoder2d_forward.1} parent=11 // pred_check
          %p203 = pneg %p76
        $region14: #{encoder2d_forward.1} parent=11 // pred_check_branch
          %205 = sbr.rel (%p203) target = $region16
        $region15: #{encoder2d_forward.1} parent=11 // pred_region
          _
        $region16: #{encoder2d_forward.1} parent=11 // pred_fallthru
          _
        // Predicated region
        $region17: #{encoder2d_forward.1} parent=11 // pred_check
          %p206 = pneg %p97
        $region18: #{encoder2d_forward.1} parent=11 // pred_check_branch
          %208 = sbr.rel (%p206) target = $region20
        $region19: #{encoder2d_forward.1} parent=11 // pred_region
          _
        $region20: #{encoder2d_forward.1} parent=11 // pred_fallthru
          _
        // Predicated region
        $region21: #{encoder2d_forward.1} parent=11 // pred_check
          %p209 = pneg %p118
        $region22: #{encoder2d_forward.1} parent=11 // pred_check_branch
          %211 = sbr.rel (%p209) target = $region24
        $region23: #{encoder2d_forward.1} parent=11 // pred_region
          _
        $region24: #{encoder2d_forward.1} parent=11 // pred_fallthru
          _
        // Predicated region
        $region25: #{encoder2d_forward.1} parent=11 // pred_check
          %p212 = pneg %p139
        $region26: #{encoder2d_forward.1} parent=11 // pred_check_branch
          %214 = sbr.rel (%p212) target = $region28
        $region27: #{encoder2d_forward.1} parent=11 // pred_region
          _
        $region28: #{encoder2d_forward.1} parent=11 // pred_fallthru
          _
        // Predicated region
        $region29: #{encoder2d_forward.1} parent=11 // pred_check
          %p215 = pneg %p160
        $region30: #{encoder2d_forward.1} parent=11 // pred_check_branch
          %217 = sbr.rel (%p215) target = $region32
        $region31: #{encoder2d_forward.1} parent=11 // pred_region
          _
        $region32: #{encoder2d_forward.1} parent=11 // pred_fallthru
          _
      $region12: #{encoder2d_forward.1} parent=5 // pred_fallthru
        _
      %p218 = scmp.lt.s32.totalorder %s15, 2
      // Predicated region
      $region33: #{encoder2d_forward.1} parent=5 // pred_check
        %p219 = pneg %p218
      $region34: #{encoder2d_forward.1} parent=5 // pred_check_branch
        %221 = sbr.rel (%p219) target = $region36
      $region35: #{encoder2d_forward.1} parent=5 // pred_region
        // Predicated region
        $region37: #{encoder2d_forward.1} parent=35 // pred_check
          %p222 = pneg %p49
        $region38: #{encoder2d_forward.1} parent=35 // pred_check_branch
          %224 = sbr.rel (%p222) target = $region40
        $region39: #{encoder2d_forward.1} parent=35 // pred_region
          %s225 = smul.u32 4, %s23
          %p226 = scmp.lt.s32.totalorder %s22, 1
          %s227 = scalar_select %p226, %s22, 1
          %p228 = scmp.lt.s32.totalorder %s225, 3
          %s229 = scalar_select %p228, %s225, 3
          %s230 = smul.addr %s227, 16
          %s231 = sadd.s32 %s229, %s230
          %s232 = smul.addr %s231, 4
          %s233 = scalar_lea.vmem %s0, %s232
          %s234 = smul.u32 4, %s23
        $region40: #{encoder2d_forward.1} parent=35 // pred_fallthru
          _
      $region36: #{encoder2d_forward.1} parent=5 // pred_fallthru
        _
      %p235 = scmp.le.s32.totalorder 1, %s15
      %p236 = scmp.lt.s32.totalorder %s15, 3
      %p237 = pnand %p235, %p236
      %p238 = pneg %p237
      // Predicated region
      $region41: #{encoder2d_forward.1} parent=5 // pred_check
        _
      $region42: #{encoder2d_forward.1} parent=5 // pred_check_branch
        %240 = sbr.rel (%p237) target = $region44
      $region43: #{encoder2d_forward.1} parent=5 // pred_region
        %s241 = ssub.s32 %s15, 1
        %s242 = smul.u32 4, %s25
        %p243 = scmp.lt.s32.totalorder %s24, 1
        %s244 = scalar_select %p243, %s24, 1
        %p245 = scmp.lt.s32.totalorder %s242, 3
        %s246 = scalar_select %p245, %s242, 3
        %s247 = smul.addr %s244, 16
        %s248 = sadd.s32 %s246, %s247
        %s249 = smul.addr %s248, 4
        %s250 = scalar_lea.vmem %s0, %s249
        %p251 = pneg %p55
        %p252 = pneg %p52
        %p253 = pneg %p76
        %p254 = pneg %p73
        %p255 = pneg %p97
        %p256 = pneg %p94
        %p257 = pneg %p118
        %p258 = pneg %p115
        %p259 = pneg %p139
        %p260 = pneg %p136
        %p261 = pneg %p160
        %p262 = pneg %p157
        %p263 = pneg %p188
        %p264 = pneg %p185
        %s265 = sand.u32 %s175, 1
        %s266 = scalar_lea.sflag [#allocation3], %s265
        %s267 = sand.u32 %s175, 1
        %s268 = smul.addr %s267, 64
        %s269 = scalar_lea.vmem [#allocation2], %s268
        %s270 = smul.u32 4, %s25
        %p271 = scmp.lt.s32.totalorder %s24, 1
        %s272 = scalar_select %p271, %s24, 1
        %p273 = scmp.lt.s32.totalorder %s270, 3
        %s274 = scalar_select %p273, %s270, 3
        %s275 = smul.addr %s272, 16
        %s276 = sadd.s32 %s274, %s275
        %s277 = smul.addr %s276, 4
        %s278 = scalar_lea.vmem %s0, %s277
        %s279 = smul.u32 4, %s25
        %s280 = smul.u32 4, %s25
        %v282 = vld [vmem:[%s278] sm:$0xff]
        %v283 = vld [vmem:[%s278 + $0x8] sm:$0xff]
        %v284 = vld [vmem:[%s278 + $0x10] sm:$0xff]
        %v285 = vld [vmem:[%s278 + $0x18] sm:$0xff]
        %v286 = vld [vmem:[%s278 + $0x20] sm:$0xff]
        %v287 = vld [vmem:[%s278 + $0x28] sm:$0xff]
        %v288 = vld [vmem:[%s278 + $0x30] sm:$0xff]
        %v289 = vld [vmem:[%s278 + $0x38] sm:$0xff]
        %v290 = vunpack.c.l.bf16 %v282
        %v291 = vunpack.c.h.bf16 %v282
        %v292 = vunpack.c.l.bf16 %v283
        %v293 = vunpack.c.h.bf16 %v283
        %v294 = vunpack.c.l.bf16 %v284
        %v295 = vunpack.c.h.bf16 %v284
        %v296 = vunpack.c.l.bf16 %v285
        %v297 = vunpack.c.h.bf16 %v285
        %v298 = vunpack.c.l.bf16 %v286
        %v299 = vunpack.c.h.bf16 %v286
        %v300 = vunpack.c.l.bf16 %v287
        %v301 = vunpack.c.h.bf16 %v287
        %v302 = vunpack.c.l.bf16 %v288
        %v303 = vunpack.c.h.bf16 %v288
        %v304 = vunpack.c.l.bf16 %v289
        %v305 = vunpack.c.h.bf16 %v289
        %v306 = vld [vmem:[%s1] sm:$0xf]
        %v307 = vld [vmem:[%s1 + $0x4] sm:$0xf]
        %v308 = vld [vmem:[%s1 + $0x8] sm:$0xf]
        %v309 = vld [vmem:[%s1 + $0xc] sm:$0xf]
        %v310 = vld [vmem:[%s4] sm:$0xff]
        %v311 = vld [vmem:[%s4 + $0x8] sm:$0xff]
        %v312 = vld [vmem:[%s4 + $0x10] sm:$0xff]
        %v313 = vld [vmem:[%s4 + $0x18] sm:$0xff]
        %315 = vset.pattern.permute.xlu0 0
        %316 = vperm.xlu0 %315, %v310
        %v317 = vpop.permute.xlu0 %316
        %320 = vset.pattern.permute.xlu0 0
        %321 = vperm.xlu0 %320, %v311
        %v322 = vpop.permute.xlu0 %321
        %325 = vset.pattern.permute.xlu0 0
        %326 = vperm.xlu0 %325, %v312
        %v327 = vpop.permute.xlu0 %326
        %330 = vset.pattern.permute.xlu0 0
        %331 = vperm.xlu0 %330, %v313
        %v332 = vpop.permute.xlu0 %331
        %v338 = vunpack.c.l.b16 %v306
        %v339 = vunpack.c.l.b16 %v307
        %v340 = vunpack.c.l.b16 %v308
        %v341 = vunpack.c.l.b16 %v309
        %v342 = vpack.c.b16 %v339, %v338
        %v343 = vpack.c.b16 %v341, %v340
        %v352 = vunpack.c.l.b16 %v282
        %v353 = vunpack.c.h.b16 %v282
        %v354 = vunpack.c.l.b16 %v283
        %v355 = vunpack.c.h.b16 %v283
        %v356 = vunpack.c.l.b16 %v284
        %v357 = vunpack.c.h.b16 %v284
        %v358 = vunpack.c.l.b16 %v285
        %v359 = vunpack.c.h.b16 %v285
        %v360 = vunpack.c.l.b16 %v286
        %v361 = vunpack.c.h.b16 %v286
        %v362 = vunpack.c.l.b16 %v287
        %v363 = vunpack.c.h.b16 %v287
        %v364 = vunpack.c.l.b16 %v288
        %v365 = vunpack.c.h.b16 %v288
        %v366 = vunpack.c.l.b16 %v289
        %v367 = vunpack.c.h.b16 %v289
        %v368 = vpack.c.b16 %v356, %v352
        %v369 = vpack.c.b16 %v357, %v353
        %v370 = vpack.c.b16 %v358, %v354
        %v371 = vpack.c.b16 %v359, %v355
        %v372 = vpack.c.b16 %v364, %v360
        %v373 = vpack.c.b16 %v365, %v361
        %v374 = vpack.c.b16 %v366, %v362
        %v375 = vpack.c.b16 %v367, %v363
        %vm384 = vcmask 261120
        %v386 = vsel %vm384, %v342, 0
        %v389 = vsel %vm384, %v343, 0
        %391 = vmatprep.subr.bf16.mxu0 %v369
        %392 = vmatpush1.bf16.msra.mxu0 %v368
        %393 = vmatprep.subr.bf16.mxu0 %v373
        %394 = vmatpush1.bf16.msra.mxu0 %v372
        %395 = vmatprep.subr.bf16.mxu0 0
        %396 = vmatpush1.bf16.msra.mxu0 0
        %397 = vmatprep.subr.bf16.mxu0 0
        %398 = vmatpush1.bf16.msra.mxu0 0
        %399 = vmatprep.subr.bf16.mxu0 0
        %400 = vmatpush1.bf16.msra.mxu0 0
        %401 = vmatprep.subr.bf16.mxu0 0
        %402 = vmatpush1.bf16.msra.mxu0 0
        %403 = vmatprep.subr.bf16.mxu0 0
        %404 = vmatpush1.bf16.msra.mxu0 0
        %405 = vmatprep.subr.bf16.mxu0 0
        %406 = vmatpush1.bf16.msra.mxu0 0
        %407 = vmatprep.subr.bf16.mxu0 0
        %408 = vmatpush1.bf16.msra.mxu0 0
        %409 = vmatprep.subr.bf16.mxu0 0
        %410 = vmatpush1.bf16.msra.mxu0 0
        %411 = vmatprep.subr.bf16.mxu0 0
        %412 = vmatpush1.bf16.msra.mxu0 0
        %413 = vmatprep.subr.bf16.mxu0 0
        %414 = vmatpush1.bf16.msra.mxu0 0
        %415 = vmatprep.subr.bf16.mxu0 0
        %416 = vmatpush1.bf16.msra.mxu0 0
        %417 = vmatprep.subr.bf16.mxu0 0
        %418 = vmatpush1.bf16.msra.mxu0 0
        %419 = vmatprep.subr.bf16.mxu0 0
        %420 = vmatpush1.bf16.msra.mxu0 0
        %421 = vmatprep.subr.bf16.mxu0 0
        %422 = vmatpush1.bf16.msra.mxu0 0
        %423 = vmatprep.mubr.bf16.mxu0 0
        %424 = vmatmul.mubr.bf16.gmra.mrb[0].mxu0 %v386
        %v425 = vpop.f32.mrb[0].mxu0
        %v426 = vadd.f32 %v317, %v425
        %v427 = vpop.f32.mrb[0].mxu0
        %v428 = vadd.f32 %v317, %v427
        %v429 = vpop.f32.mrb[0].mxu0
        %v430 = vadd.f32 %v322, %v429
        %v431 = vpop.f32.mrb[0].mxu0
        %v432 = vadd.f32 %v322, %v431
        %433 = vmatprep.mubr.bf16.mxu0 0
        %434 = vmatmul.mubr.bf16.gmra.mrb[0].mxu0 %v389
        %v435 = vpop.f32.mrb[0].mxu0
        %v436 = vadd.f32 %v327, %v435
        %v437 = vpop.f32.mrb[0].mxu0
        %v438 = vadd.f32 %v327, %v437
        %v439 = vpop.f32.mrb[0].mxu0
        %v440 = vadd.f32 %v332, %v439
        %v441 = vpop.f32.mrb[0].mxu0
        %v442 = vadd.f32 %v332, %v441
        %443 = vdwg.mxu0
        %444 = vmatprep.subr.bf16.mxu0 %v371
        %445 = vmatpush1.bf16.msra.mxu0 %v370
        %446 = vmatprep.subr.bf16.mxu0 %v375
        %447 = vmatpush1.bf16.msra.mxu0 %v374
        %448 = vmatprep.subr.bf16.mxu0 0
        %449 = vmatpush1.bf16.msra.mxu0 0
        %450 = vmatprep.subr.bf16.mxu0 0
        %451 = vmatpush1.bf16.msra.mxu0 0
        %452 = vmatprep.subr.bf16.mxu0 0
        %453 = vmatpush1.bf16.msra.mxu0 0
        %454 = vmatprep.subr.bf16.mxu0 0
        %455 = vmatpush1.bf16.msra.mxu0 0
        %456 = vmatprep.subr.bf16.mxu0 0
        %457 = vmatpush1.bf16.msra.mxu0 0
        %458 = vmatprep.subr.bf16.mxu0 0
        %459 = vmatpush1.bf16.msra.mxu0 0
        %460 = vmatprep.subr.bf16.mxu0 0
        %461 = vmatpush1.bf16.msra.mxu0 0
        %462 = vmatprep.subr.bf16.mxu0 0
        %463 = vmatpush1.bf16.msra.mxu0 0
        %464 = vmatprep.subr.bf16.mxu0 0
        %465 = vmatpush1.bf16.msra.mxu0 0
        %466 = vmatprep.subr.bf16.mxu0 0
        %467 = vmatpush1.bf16.msra.mxu0 0
        %468 = vmatprep.subr.bf16.mxu0 0
        %469 = vmatpush1.bf16.msra.mxu0 0
        %470 = vmatprep.subr.bf16.mxu0 0
        %471 = vmatpush1.bf16.msra.mxu0 0
        %472 = vmatprep.subr.bf16.mxu0 0
        %473 = vmatpush1.bf16.msra.mxu0 0
        %474 = vmatprep.subr.bf16.mxu0 0
        %475 = vmatpush1.bf16.msra.mxu0 0
        %476 = vmatprep.mubr.bf16.mxu0 0
        %477 = vmatmul.mubr.bf16.gmra.mrb[0].mxu0 %v386
        %v478 = vpop.f32.mrb[0].mxu0
        %v479 = vadd.f32 %v317, %v478
        %v480 = vpop.f32.mrb[0].mxu0
        %v481 = vadd.f32 %v317, %v480
        %v482 = vpop.f32.mrb[0].mxu0
        %v483 = vadd.f32 %v322, %v482
        %v484 = vpop.f32.mrb[0].mxu0
        %v485 = vadd.f32 %v322, %v484
        %486 = vmatprep.mubr.bf16.mxu0 0
        %487 = vmatmul.mubr.bf16.gmra.mrb[0].mxu0 %v389
        %v488 = vpop.f32.mrb[0].mxu0
        %v489 = vadd.f32 %v327, %v488
        %v490 = vpop.f32.mrb[0].mxu0
        %v491 = vadd.f32 %v327, %v490
        %v492 = vpop.f32.mrb[0].mxu0
        %v493 = vadd.f32 %v332, %v492
        %v494 = vpop.f32.mrb[0].mxu0
        %v495 = vadd.f32 %v332, %v494
        %496 = vdwg.mxu0
        %vm497 = vcmp.gt.f32.partialorder %v426, 0.0
        %vm498 = vcmp.gt.f32.partialorder %v428, 0.0
        %vm499 = vcmp.gt.f32.partialorder %v479, 0.0
        %vm500 = vcmp.gt.f32.partialorder %v481, 0.0
        %vm501 = vcmp.gt.f32.partialorder %v430, 0.0
        %vm502 = vcmp.gt.f32.partialorder %v432, 0.0
        %vm503 = vcmp.gt.f32.partialorder %v483, 0.0
        %vm504 = vcmp.gt.f32.partialorder %v485, 0.0
        %vm505 = vcmp.gt.f32.partialorder %v436, 0.0
        %vm506 = vcmp.gt.f32.partialorder %v438, 0.0
        %vm507 = vcmp.gt.f32.partialorder %v489, 0.0
        %vm508 = vcmp.gt.f32.partialorder %v491, 0.0
        %vm509 = vcmp.gt.f32.partialorder %v440, 0.0
        %vm510 = vcmp.gt.f32.partialorder %v442, 0.0
        %vm511 = vcmp.gt.f32.partialorder %v493, 0.0
        %vm512 = vcmp.gt.f32.partialorder %v495, 0.0
        %v513 = vmul.f32 %v426, 0.2
        %v514 = vmul.f32 %v428, 0.2
        %v515 = vmul.f32 %v479, 0.2
        %v516 = vmul.f32 %v481, 0.2
        %v517 = vmul.f32 %v430, 0.2
        %v518 = vmul.f32 %v432, 0.2
        %v519 = vmul.f32 %v483, 0.2
        %v520 = vmul.f32 %v485, 0.2
        %v521 = vmul.f32 %v436, 0.2
        %v522 = vmul.f32 %v438, 0.2
        %v523 = vmul.f32 %v489, 0.2
        %v524 = vmul.f32 %v491, 0.2
        %v525 = vmul.f32 %v440, 0.2
        %v526 = vmul.f32 %v442, 0.2
        %v527 = vmul.f32 %v493, 0.2
        %v528 = vmul.f32 %v495, 0.2
        %v529 = vsel %vm497, %v426, %v513
        %v530 = vsel %vm498, %v428, %v514
        %v531 = vsel %vm499, %v479, %v515
        %v532 = vsel %vm500, %v481, %v516
        %v533 = vsel %vm501, %v430, %v517
        %v534 = vsel %vm502, %v432, %v518
        %v535 = vsel %vm503, %v483, %v519
        %v536 = vsel %vm504, %v485, %v520
        %v537 = vsel %vm505, %v436, %v521
        %v538 = vsel %vm506, %v438, %v522
        %v539 = vsel %vm507, %v489, %v523
        %v540 = vsel %vm508, %v491, %v524
        %v541 = vsel %vm509, %v440, %v525
        %v542 = vsel %vm510, %v442, %v526
        %v543 = vsel %vm511, %v493, %v527
        %v544 = vsel %vm512, %v495, %v528
        %v545 = vld [vmem:[%s2] sm:$0xf]
        %v546 = vld [vmem:[%s2 + $0x4] sm:$0xf]
        %v547 = vld [vmem:[%s2 + $0x8] sm:$0xf]
        %v548 = vld [vmem:[%s2 + $0xc] sm:$0xf]
        %v549 = vpack.c.bf16 %v533, %v529
        %v550 = vpack.c.bf16 %v534, %v530
        %v551 = vpack.c.bf16 %v535, %v531
        %v552 = vpack.c.bf16 %v536, %v532
        %v553 = vpack.c.bf16 %v541, %v537
        %v554 = vpack.c.bf16 %v542, %v538
        %v555 = vpack.c.bf16 %v543, %v539
        %v556 = vpack.c.bf16 %v544, %v540
        %s557 = scalar_lea.vmem %s4, 32
        %v558 = vld [vmem:[%s557] sm:$0xff]
        %v559 = vld [vmem:[%s557 + $0x8] sm:$0xff]
        %v560 = vld [vmem:[%s557 + $0x10] sm:$0xff]
        %v561 = vld [vmem:[%s557 + $0x18] sm:$0xff]
        %563 = vset.pattern.permute.xlu0 0
        %564 = vperm.xlu0 %563, %v558
        %v565 = vpop.permute.xlu0 %564
        %568 = vset.pattern.permute.xlu0 0
        %569 = vperm.xlu0 %568, %v559
        %v570 = vpop.permute.xlu0 %569
        %573 = vset.pattern.permute.xlu0 0
        %574 = vperm.xlu0 %573, %v560
        %v575 = vpop.permute.xlu0 %574
        %578 = vset.pattern.permute.xlu0 0
        %579 = vperm.xlu0 %578, %v561
        %v580 = vpop.permute.xlu0 %579
        %v586 = vunpack.c.l.b16 %v545
        %v587 = vunpack.c.l.b16 %v546
        %v588 = vunpack.c.l.b16 %v547
        %v589 = vunpack.c.l.b16 %v548
        %v590 = vpack.c.b16 %v587, %v586
        %v591 = vpack.c.b16 %v589, %v588
        %v593 = vsel %vm384, %v590, 0
        %v596 = vsel %vm384, %v591, 0
        %598 = vmatprep.subr.bf16.mxu0 %v550
        %599 = vmatpush1.bf16.msra.mxu0 %v549
        %600 = vmatprep.subr.bf16.mxu0 %v554
        %601 = vmatpush1.bf16.msra.mxu0 %v553
        %602 = vmatprep.subr.bf16.mxu0 0
        %603 = vmatpush1.bf16.msra.mxu0 0
        %604 = vmatprep.subr.bf16.mxu0 0
        %605 = vmatpush1.bf16.msra.mxu0 0
        %606 = vmatprep.subr.bf16.mxu0 0
        %607 = vmatpush1.bf16.msra.mxu0 0
        %608 = vmatprep.subr.bf16.mxu0 0
        %609 = vmatpush1.bf16.msra.mxu0 0
        %610 = vmatprep.subr.bf16.mxu0 0
        %611 = vmatpush1.bf16.msra.mxu0 0
        %612 = vmatprep.subr.bf16.mxu0 0
        %613 = vmatpush1.bf16.msra.mxu0 0
        %614 = vmatprep.subr.bf16.mxu0 0
        %615 = vmatpush1.bf16.msra.mxu0 0
        %616 = vmatprep.subr.bf16.mxu0 0
        %617 = vmatpush1.bf16.msra.mxu0 0
        %618 = vmatprep.subr.bf16.mxu0 0
        %619 = vmatpush1.bf16.msra.mxu0 0
        %620 = vmatprep.subr.bf16.mxu0 0
        %621 = vmatpush1.bf16.msra.mxu0 0
        %622 = vmatprep.subr.bf16.mxu0 0
        %623 = vmatpush1.bf16.msra.mxu0 0
        %624 = vmatprep.subr.bf16.mxu0 0
        %625 = vmatpush1.bf16.msra.mxu0 0
        %626 = vmatprep.subr.bf16.mxu0 0
        %627 = vmatpush1.bf16.msra.mxu0 0
        %628 = vmatprep.subr.bf16.mxu0 0
        %629 = vmatpush1.bf16.msra.mxu0 0
        %630 = vmatprep.mubr.bf16.mxu0 0
        %631 = vmatmul.mubr.bf16.gmra.mrb[0].mxu0 %v593
        %v632 = vpop.f32.mrb[0].mxu0
        %v633 = vadd.f32 %v565, %v632
        %v634 = vpop.f32.mrb[0].mxu0
        %v635 = vadd.f32 %v565, %v634
        %v636 = vpop.f32.mrb[0].mxu0
        %v637 = vadd.f32 %v570, %v636
        %v638 = vpop.f32.mrb[0].mxu0
        %v639 = vadd.f32 %v570, %v638
        %640 = vmatprep.mubr.bf16.mxu0 0
        %641 = vmatmul.mubr.bf16.gmra.mrb[0].mxu0 %v596
        %v642 = vpop.f32.mrb[0].mxu0
        %v643 = vadd.f32 %v575, %v642
        %v644 = vpop.f32.mrb[0].mxu0
        %v645 = vadd.f32 %v575, %v644
        %v646 = vpop.f32.mrb[0].mxu0
        %v647 = vadd.f32 %v580, %v646
        %v648 = vpop.f32.mrb[0].mxu0
        %v649 = vadd.f32 %v580, %v648
        %650 = vdwg.mxu0
        %651 = vmatprep.subr.bf16.mxu0 %v552
        %652 = vmatpush1.bf16.msra.mxu0 %v551
        %653 = vmatprep.subr.bf16.mxu0 %v556
        %654 = vmatpush1.bf16.msra.mxu0 %v555
        %655 = vmatprep.subr.bf16.mxu0 0
        %656 = vmatpush1.bf16.msra.mxu0 0
        %657 = vmatprep.subr.bf16.mxu0 0
        %658 = vmatpush1.bf16.msra.mxu0 0
        %659 = vmatprep.subr.bf16.mxu0 0
        %660 = vmatpush1.bf16.msra.mxu0 0
        %661 = vmatprep.subr.bf16.mxu0 0
        %662 = vmatpush1.bf16.msra.mxu0 0
        %663 = vmatprep.subr.bf16.mxu0 0
        %664 = vmatpush1.bf16.msra.mxu0 0
        %665 = vmatprep.subr.bf16.mxu0 0
        %666 = vmatpush1.bf16.msra.mxu0 0
        %667 = vmatprep.subr.bf16.mxu0 0
        %668 = vmatpush1.bf16.msra.mxu0 0
        %669 = vmatprep.subr.bf16.mxu0 0
        %670 = vmatpush1.bf16.msra.mxu0 0
        %671 = vmatprep.subr.bf16.mxu0 0
        %672 = vmatpush1.bf16.msra.mxu0 0
        %673 = vmatprep.subr.bf16.mxu0 0
        %674 = vmatpush1.bf16.msra.mxu0 0
        %675 = vmatprep.subr.bf16.mxu0 0
        %676 = vmatpush1.bf16.msra.mxu0 0
        %677 = vmatprep.subr.bf16.mxu0 0
        %678 = vmatpush1.bf16.msra.mxu0 0
        %679 = vmatprep.subr.bf16.mxu0 0
        %680 = vmatpush1.bf16.msra.mxu0 0
        %681 = vmatprep.subr.bf16.mxu0 0
        %682 = vmatpush1.bf16.msra.mxu0 0
        %683 = vmatprep.mubr.bf16.mxu0 0
        %684 = vmatmul.mubr.bf16.gmra.mrb[0].mxu0 %v593
        %v685 = vpop.f32.mrb[0].mxu0
        %v686 = vadd.f32 %v565, %v685
        %v687 = vpop.f32.mrb[0].mxu0
        %v688 = vadd.f32 %v565, %v687
        %v689 = vpop.f32.mrb[0].mxu0
        %v690 = vadd.f32 %v570, %v689
        %v691 = vpop.f32.mrb[0].mxu0
        %v692 = vadd.f32 %v570, %v691
        %693 = vmatprep.mubr.bf16.mxu0 0
        %694 = vmatmul.mubr.bf16.gmra.mrb[0].mxu0 %v596
        %v695 = vpop.f32.mrb[0].mxu0
        %v696 = vadd.f32 %v575, %v695
        %v697 = vpop.f32.mrb[0].mxu0
        %v698 = vadd.f32 %v575, %v697
        %v699 = vpop.f32.mrb[0].mxu0
        %v700 = vadd.f32 %v580, %v699
        %v701 = vpop.f32.mrb[0].mxu0
        %v702 = vadd.f32 %v580, %v701
        %703 = vdwg.mxu0
        %vm704 = vcmp.gt.f32.partialorder %v633, 0.0
        %vm705 = vcmp.gt.f32.partialorder %v635, 0.0
        %vm706 = vcmp.gt.f32.partialorder %v686, 0.0
        %vm707 = vcmp.gt.f32.partialorder %v688, 0.0
        %vm708 = vcmp.gt.f32.partialorder %v637, 0.0
        %vm709 = vcmp.gt.f32.partialorder %v639, 0.0
        %vm710 = vcmp.gt.f32.partialorder %v690, 0.0
        %vm711 = vcmp.gt.f32.partialorder %v692, 0.0
        %vm712 = vcmp.gt.f32.partialorder %v643, 0.0
        %vm713 = vcmp.gt.f32.partialorder %v645, 0.0
        %vm714 = vcmp.gt.f32.partialorder %v696, 0.0
        %vm715 = vcmp.gt.f32.partialorder %v698, 0.0
        %vm716 = vcmp.gt.f32.partialorder %v647, 0.0
        %vm717 = vcmp.gt.f32.partialorder %v649, 0.0
        %vm718 = vcmp.gt.f32.partialorder %v700, 0.0
        %vm719 = vcmp.gt.f32.partialorder %v702, 0.0
        %v720 = vmul.f32 %v633, 0.2
        %v721 = vmul.f32 %v635, 0.2
        %v722 = vmul.f32 %v686, 0.2
        %v723 = vmul.f32 %v688, 0.2
        %v724 = vmul.f32 %v637, 0.2
        %v725 = vmul.f32 %v639, 0.2
        %v726 = vmul.f32 %v690, 0.2
        %v727 = vmul.f32 %v692, 0.2
        %v728 = vmul.f32 %v643, 0.2
        %v729 = vmul.f32 %v645, 0.2
        %v730 = vmul.f32 %v696, 0.2
        %v731 = vmul.f32 %v698, 0.2
        %v732 = vmul.f32 %v647, 0.2
        %v733 = vmul.f32 %v649, 0.2
        %v734 = vmul.f32 %v700, 0.2
        %v735 = vmul.f32 %v702, 0.2
        %v736 = vsel %vm704, %v633, %v720
        %v737 = vsel %vm705, %v635, %v721
        %v738 = vsel %vm706, %v686, %v722
        %v739 = vsel %vm707, %v688, %v723
        %v740 = vsel %vm708, %v637, %v724
        %v741 = vsel %vm709, %v639, %v725
        %v742 = vsel %vm710, %v690, %v726
        %v743 = vsel %vm711, %v692, %v727
        %v744 = vsel %vm712, %v643, %v728
        %v745 = vsel %vm713, %v645, %v729
        %v746 = vsel %vm714, %v696, %v730
        %v747 = vsel %vm715, %v698, %v731
        %v748 = vsel %vm716, %v647, %v732
        %v749 = vsel %vm717, %v649, %v733
        %v750 = vsel %vm718, %v700, %v734
        %v751 = vsel %vm719, %v702, %v735
        %v752 = vadd.f32 %v290, %v736
        %v753 = vadd.f32 %v291, %v737
        %v754 = vadd.f32 %v292, %v738
        %v755 = vadd.f32 %v293, %v739
        %v756 = vadd.f32 %v294, %v740
        %v757 = vadd.f32 %v295, %v741
        %v758 = vadd.f32 %v296, %v742
        %v759 = vadd.f32 %v297, %v743
        %v760 = vadd.f32 %v298, %v744
        %v761 = vadd.f32 %v299, %v745
        %v762 = vadd.f32 %v300, %v746
        %v763 = vadd.f32 %v301, %v747
        %v764 = vadd.f32 %v302, %v748
        %v765 = vadd.f32 %v303, %v749
        %v766 = vadd.f32 %v304, %v750
        %v767 = vadd.f32 %v305, %v751
        %s768 = scalar_lea.vmem %s1, 16
        %v769 = vld [vmem:[%s768] sm:$0xf]
        %v770 = vld [vmem:[%s768 + $0x4] sm:$0xf]
        %v771 = vld [vmem:[%s768 + $0x8] sm:$0xf]
        %v772 = vld [vmem:[%s768 + $0xc] sm:$0xf]
        %v773 = vpack.c.bf16 %v756, %v752
        %v774 = vpack.c.bf16 %v757, %v753
        %v775 = vpack.c.bf16 %v758, %v754
        %v776 = vpack.c.bf16 %v759, %v755
        %v777 = vpack.c.bf16 %v764, %v760
        %v778 = vpack.c.bf16 %v765, %v761
        %v779 = vpack.c.bf16 %v766, %v762
        %v780 = vpack.c.bf16 %v767, %v763
        %s781 = scalar_lea.vmem %s4, 64
        %v782 = vld [vmem:[%s781] sm:$0xff]
        %v783 = vld [vmem:[%s781 + $0x8] sm:$0xff]
        %v784 = vld [vmem:[%s781 + $0x10] sm:$0xff]
        %v785 = vld [vmem:[%s781 + $0x18] sm:$0xff]
        %787 = vset.pattern.permute.xlu0 0
        %788 = vperm.xlu0 %787, %v782
        %v789 = vpop.permute.xlu0 %788
        %792 = vset.pattern.permute.xlu0 0
        %793 = vperm.xlu0 %792, %v783
        %v794 = vpop.permute.xlu0 %793
        %797 = vset.pattern.permute.xlu0 0
        %798 = vperm.xlu0 %797, %v784
        %v799 = vpop.permute.xlu0 %798
        %802 = vset.pattern.permute.xlu0 0
        %803 = vperm.xlu0 %802, %v785
        %v804 = vpop.permute.xlu0 %803
        %v810 = vunpack.c.l.b16 %v769
        %v811 = vunpack.c.l.b16 %v770
        %v812 = vunpack.c.l.b16 %v771
        %v813 = vunpack.c.l.b16 %v772
        %v814 = vpack.c.b16 %v811, %v810
        %v815 = vpack.c.b16 %v813, %v812
        %v817 = vsel %vm384, %v814, 0
        %v820 = vsel %vm384, %v815, 0
        %822 = vmatprep.subr.bf16.mxu0 %v774
        %823 = vmatpush1.bf16.msra.mxu0 %v773
        %824 = vmatprep.subr.bf16.mxu0 %v778
        %825 = vmatpush1.bf16.msra.mxu0 %v777
        %826 = vmatprep.subr.bf16.mxu0 0
        %827 = vmatpush1.bf16.msra.mxu0 0
        %828 = vmatprep.subr.bf16.mxu0 0
        %829 = vmatpush1.bf16.msra.mxu0 0
        %830 = vmatprep.subr.bf16.mxu0 0
        %831 = vmatpush1.bf16.msra.mxu0 0
        %832 = vmatprep.subr.bf16.mxu0 0
        %833 = vmatpush1.bf16.msra.mxu0 0
        %834 = vmatprep.subr.bf16.mxu0 0
        %835 = vmatpush1.bf16.msra.mxu0 0
        %836 = vmatprep.subr.bf16.mxu0 0
        %837 = vmatpush1.bf16.msra.mxu0 0
        %838 = vmatprep.subr.bf16.mxu0 0
        %839 = vmatpush1.bf16.msra.mxu0 0
        %840 = vmatprep.subr.bf16.mxu0 0
        %841 = vmatpush1.bf16.msra.mxu0 0
        %842 = vmatprep.subr.bf16.mxu0 0
        %843 = vmatpush1.bf16.msra.mxu0 0
        %844 = vmatprep.subr.bf16.mxu0 0
        %845 = vmatpush1.bf16.msra.mxu0 0
        %846 = vmatprep.subr.bf16.mxu0 0
        %847 = vmatpush1.bf16.msra.mxu0 0
        %848 = vmatprep.subr.bf16.mxu0 0
        %849 = vmatpush1.bf16.msra.mxu0 0
        %850 = vmatprep.subr.bf16.mxu0 0
        %851 = vmatpush1.bf16.msra.mxu0 0
        %852 = vmatprep.subr.bf16.mxu0 0
        %853 = vmatpush1.bf16.msra.mxu0 0
        %854 = vmatprep.mubr.bf16.mxu0 0
        %855 = vmatmul.mubr.bf16.gmra.mrb[0].mxu0 %v817
        %v856 = vpop.f32.mrb[0].mxu0
        %v857 = vadd.f32 %v789, %v856
        %v858 = vpop.f32.mrb[0].mxu0
        %v859 = vadd.f32 %v789, %v858
        %v860 = vpop.f32.mrb[0].mxu0
        %v861 = vadd.f32 %v794, %v860
        %v862 = vpop.f32.mrb[0].mxu0
        %v863 = vadd.f32 %v794, %v862
        %864 = vmatprep.mubr.bf16.mxu0 0
        %865 = vmatmul.mubr.bf16.gmra.mrb[0].mxu0 %v820
        %v866 = vpop.f32.mrb[0].mxu0
        %v867 = vadd.f32 %v799, %v866
        %v868 = vpop.f32.mrb[0].mxu0
        %v869 = vadd.f32 %v799, %v868
        %v870 = vpop.f32.mrb[0].mxu0
        %v871 = vadd.f32 %v804, %v870
        %v872 = vpop.f32.mrb[0].mxu0
        %v873 = vadd.f32 %v804, %v872
        %874 = vdwg.mxu0
        %875 = vmatprep.subr.bf16.mxu0 %v776
        %876 = vmatpush1.bf16.msra.mxu0 %v775
        %877 = vmatprep.subr.bf16.mxu0 %v780
        %878 = vmatpush1.bf16.msra.mxu0 %v779
        %879 = vmatprep.subr.bf16.mxu0 0
        %880 = vmatpush1.bf16.msra.mxu0 0
        %881 = vmatprep.subr.bf16.mxu0 0
        %882 = vmatpush1.bf16.msra.mxu0 0
        %883 = vmatprep.subr.bf16.mxu0 0
        %884 = vmatpush1.bf16.msra.mxu0 0
        %885 = vmatprep.subr.bf16.mxu0 0
        %886 = vmatpush1.bf16.msra.mxu0 0
        %887 = vmatprep.subr.bf16.mxu0 0
        %888 = vmatpush1.bf16.msra.mxu0 0
        %889 = vmatprep.subr.bf16.mxu0 0
        %890 = vmatpush1.bf16.msra.mxu0 0
        %891 = vmatprep.subr.bf16.mxu0 0
        %892 = vmatpush1.bf16.msra.mxu0 0
        %893 = vmatprep.subr.bf16.mxu0 0
        %894 = vmatpush1.bf16.msra.mxu0 0
        %895 = vmatprep.subr.bf16.mxu0 0
        %896 = vmatpush1.bf16.msra.mxu0 0
        %897 = vmatprep.subr.bf16.mxu0 0
        %898 = vmatpush1.bf16.msra.mxu0 0
        %899 = vmatprep.subr.bf16.mxu0 0
        %900 = vmatpush1.bf16.msra.mxu0 0
        %901 = vmatprep.subr.bf16.mxu0 0
        %902 = vmatpush1.bf16.msra.mxu0 0
        %903 = vmatprep.subr.bf16.mxu0 0
        %904 = vmatpush1.bf16.msra.mxu0 0
        %905 = vmatprep.subr.bf16.mxu0 0
        %906 = vmatpush1.bf16.msra.mxu0 0
        %907 = vmatprep.mubr.bf16.mxu0 0
        %908 = vmatmul.mubr.bf16.gmra.mrb[0].mxu0 %v817
        %v909 = vpop.f32.mrb[0].mxu0
        %v910 = vadd.f32 %v789, %v909
        %v911 = vpop.f32.mrb[0].mxu0
        %v912 = vadd.f32 %v789, %v911
        %v913 = vpop.f32.mrb[0].mxu0
        %v914 = vadd.f32 %v794, %v913
        %v915 = vpop.f32.mrb[0].mxu0
        %v916 = vadd.f32 %v794, %v915
        %917 = vmatprep.mubr.bf16.mxu0 0
        %918 = vmatmul.mubr.bf16.gmra.mrb[0].mxu0 %v820
        %v919 = vpop.f32.mrb[0].mxu0
        %v920 = vadd.f32 %v799, %v919
        %v921 = vpop.f32.mrb[0].mxu0
        %v922 = vadd.f32 %v799, %v921
        %v923 = vpop.f32.mrb[0].mxu0
        %v924 = vadd.f32 %v804, %v923
        %v925 = vpop.f32.mrb[0].mxu0
        %v926 = vadd.f32 %v804, %v925
        %927 = vdwg.mxu0
        %vm928 = vcmp.gt.f32.partialorder %v857, 0.0
        %vm929 = vcmp.gt.f32.partialorder %v859, 0.0
        %vm930 = vcmp.gt.f32.partialorder %v910, 0.0
        %vm931 = vcmp.gt.f32.partialorder %v912, 0.0
        %vm932 = vcmp.gt.f32.partialorder %v861, 0.0
        %vm933 = vcmp.gt.f32.partialorder %v863, 0.0
        %vm934 = vcmp.gt.f32.partialorder %v914, 0.0
        %vm935 = vcmp.gt.f32.partialorder %v916, 0.0
        %vm936 = vcmp.gt.f32.partialorder %v867, 0.0
        %vm937 = vcmp.gt.f32.partialorder %v869, 0.0
        %vm938 = vcmp.gt.f32.partialorder %v920, 0.0
        %vm939 = vcmp.gt.f32.partialorder %v922, 0.0
        %vm940 = vcmp.gt.f32.partialorder %v871, 0.0
        %vm941 = vcmp.gt.f32.partialorder %v873, 0.0
        %vm942 = vcmp.gt.f32.partialorder %v924, 0.0
        %vm943 = vcmp.gt.f32.partialorder %v926, 0.0
        %v944 = vmul.f32 %v857, 0.2
        %v945 = vmul.f32 %v859, 0.2
        %v946 = vmul.f32 %v910, 0.2
        %v947 = vmul.f32 %v912, 0.2
        %v948 = vmul.f32 %v861, 0.2
        %v949 = vmul.f32 %v863, 0.2
        %v950 = vmul.f32 %v914, 0.2
        %v951 = vmul.f32 %v916, 0.2
        %v952 = vmul.f32 %v867, 0.2
        %v953 = vmul.f32 %v869, 0.2
        %v954 = vmul.f32 %v920, 0.2
        %v955 = vmul.f32 %v922, 0.2
        %v956 = vmul.f32 %v871, 0.2
        %v957 = vmul.f32 %v873, 0.2
        %v958 = vmul.f32 %v924, 0.2
        %v959 = vmul.f32 %v926, 0.2
        %v960 = vsel %vm928, %v857, %v944
        %v961 = vsel %vm929, %v859, %v945
        %v962 = vsel %vm930, %v910, %v946
        %v963 = vsel %vm931, %v912, %v947
        %v964 = vsel %vm932, %v861, %v948
        %v965 = vsel %vm933, %v863, %v949
        %v966 = vsel %vm934, %v914, %v950
        %v967 = vsel %vm935, %v916, %v951
        %v968 = vsel %vm936, %v867, %v952
        %v969 = vsel %vm937, %v869, %v953
        %v970 = vsel %vm938, %v920, %v954
        %v971 = vsel %vm939, %v922, %v955
        %v972 = vsel %vm940, %v871, %v956
        %v973 = vsel %vm941, %v873, %v957
        %v974 = vsel %vm942, %v924, %v958
        %v975 = vsel %vm943, %v926, %v959
        %s976 = scalar_lea.vmem %s2, 16
        %v977 = vld [vmem:[%s976] sm:$0xf]
        %v978 = vld [vmem:[%s976 + $0x4] sm:$0xf]
        %v979 = vld [vmem:[%s976 + $0x8] sm:$0xf]
        %v980 = vld [vmem:[%s976 + $0xc] sm:$0xf]
        %v981 = vpack.c.bf16 %v964, %v960
        %v982 = vpack.c.bf16 %v965, %v961
        %v983 = vpack.c.bf16 %v966, %v962
        %v984 = vpack.c.bf16 %v967, %v963
        %v985 = vpack.c.bf16 %v972, %v968
        %v986 = vpack.c.bf16 %v973, %v969
        %v987 = vpack.c.bf16 %v974, %v970
        %v988 = vpack.c.bf16 %v975, %v971
        %s989 = scalar_lea.vmem %s4, 96
        %v990 = vld [vmem:[%s989] sm:$0xff]
        %v991 = vld [vmem:[%s989 + $0x8] sm:$0xff]
        %v992 = vld [vmem:[%s989 + $0x10] sm:$0xff]
        %v993 = vld [vmem:[%s989 + $0x18] sm:$0xff]
        %995 = vset.pattern.permute.xlu0 0
        %996 = vperm.xlu0 %995, %v990
        %v997 = vpop.permute.xlu0 %996
        %1000 = vset.pattern.permute.xlu0 0
        %1001 = vperm.xlu0 %1000, %v991
        %v1002 = vpop.permute.xlu0 %1001
        %1005 = vset.pattern.permute.xlu0 0
        %1006 = vperm.xlu0 %1005, %v992
        %v1007 = vpop.permute.xlu0 %1006
        %1010 = vset.pattern.permute.xlu0 0
        %1011 = vperm.xlu0 %1010, %v993
        %v1012 = vpop.permute.xlu0 %1011
        %v1018 = vunpack.c.l.b16 %v977
        %v1019 = vunpack.c.l.b16 %v978
        %v1020 = vunpack.c.l.b16 %v979
        %v1021 = vunpack.c.l.b16 %v980
        %v1022 = vpack.c.b16 %v1019, %v1018
        %v1023 = vpack.c.b16 %v1021, %v1020
        %v1025 = vsel %vm384, %v1022, 0
        %v1028 = vsel %vm384, %v1023, 0
        %1030 = vmatprep.subr.bf16.mxu0 %v982
        %1031 = vmatpush1.bf16.msra.mxu0 %v981
        %1032 = vmatprep.subr.bf16.mxu0 %v986
        %1033 = vmatpush1.bf16.msra.mxu0 %v985
        %1034 = vmatprep.subr.bf16.mxu0 0
        %1035 = vmatpush1.bf16.msra.mxu0 0
        %1036 = vmatprep.subr.bf16.mxu0 0
        %1037 = vmatpush1.bf16.msra.mxu0 0
        %1038 = vmatprep.subr.bf16.mxu0 0
        %1039 = vmatpush1.bf16.msra.mxu0 0
        %1040 = vmatprep.subr.bf16.mxu0 0
        %1041 = vmatpush1.bf16.msra.mxu0 0
        %1042 = vmatprep.subr.bf16.mxu0 0
        %1043 = vmatpush1.bf16.msra.mxu0 0
        %1044 = vmatprep.subr.bf16.mxu0 0
        %1045 = vmatpush1.bf16.msra.mxu0 0
        %1046 = vmatprep.subr.bf16.mxu0 0
        %1047 = vmatpush1.bf16.msra.mxu0 0
        %1048 = vmatprep.subr.bf16.mxu0 0
        %1049 = vmatpush1.bf16.msra.mxu0 0
        %1050 = vmatprep.subr.bf16.mxu0 0
        %1051 = vmatpush1.bf16.msra.mxu0 0
        %1052 = vmatprep.subr.bf16.mxu0 0
        %1053 = vmatpush1.bf16.msra.mxu0 0
        %1054 = vmatprep.subr.bf16.mxu0 0
        %1055 = vmatpush1.bf16.msra.mxu0 0
        %1056 = vmatprep.subr.bf16.mxu0 0
        %1057 = vmatpush1.bf16.msra.mxu0 0
        %1058 = vmatprep.subr.bf16.mxu0 0
        %1059 = vmatpush1.bf16.msra.mxu0 0
        %1060 = vmatprep.subr.bf16.mxu0 0
        %1061 = vmatpush1.bf16.msra.mxu0 0
        %1062 = vmatprep.mubr.bf16.mxu0 0
        %1063 = vmatmul.mubr.bf16.gmra.mrb[0].mxu0 %v1025
        %v1064 = vpop.f32.mrb[0].mxu0
        %v1065 = vadd.f32 %v997, %v1064
        %v1066 = vpop.f32.mrb[0].mxu0
        %v1067 = vadd.f32 %v997, %v1066
        %v1068 = vpop.f32.mrb[0].mxu0
        %v1069 = vadd.f32 %v1002, %v1068
        %v1070 = vpop.f32.mrb[0].mxu0
        %v1071 = vadd.f32 %v1002, %v1070
        %1072 = vmatprep.mubr.bf16.mxu0 0
        %1073 = vmatmul.mubr.bf16.gmra.mrb[0].mxu0 %v1028
        %v1074 = vpop.f32.mrb[0].mxu0
        %v1075 = vadd.f32 %v1007, %v1074
        %v1076 = vpop.f32.mrb[0].mxu0
        %v1077 = vadd.f32 %v1007, %v1076
        %v1078 = vpop.f32.mrb[0].mxu0
        %v1079 = vadd.f32 %v1012, %v1078
        %v1080 = vpop.f32.mrb[0].mxu0
        %v1081 = vadd.f32 %v1012, %v1080
        %1082 = vdwg.mxu0
        %1083 = vmatprep.subr.bf16.mxu0 %v984
        %1084 = vmatpush1.bf16.msra.mxu0 %v983
        %1085 = vmatprep.subr.bf16.mxu0 %v988
        %1086 = vmatpush1.bf16.msra.mxu0 %v987
        %1087 = vmatprep.subr.bf16.mxu0 0
        %1088 = vmatpush1.bf16.msra.mxu0 0
        %1089 = vmatprep.subr.bf16.mxu0 0
        %1090 = vmatpush1.bf16.msra.mxu0 0
        %1091 = vmatprep.subr.bf16.mxu0 0
        %1092 = vmatpush1.bf16.msra.mxu0 0
        %1093 = vmatprep.subr.bf16.mxu0 0
        %1094 = vmatpush1.bf16.msra.mxu0 0
        %1095 = vmatprep.subr.bf16.mxu0 0
        %1096 = vmatpush1.bf16.msra.mxu0 0
        %1097 = vmatprep.subr.bf16.mxu0 0
        %1098 = vmatpush1.bf16.msra.mxu0 0
        %1099 = vmatprep.subr.bf16.mxu0 0
        %1100 = vmatpush1.bf16.msra.mxu0 0
        %1101 = vmatprep.subr.bf16.mxu0 0
        %1102 = vmatpush1.bf16.msra.mxu0 0
        %1103 = vmatprep.subr.bf16.mxu0 0
        %1104 = vmatpush1.bf16.msra.mxu0 0
        %1105 = vmatprep.subr.bf16.mxu0 0
        %1106 = vmatpush1.bf16.msra.mxu0 0
        %1107 = vmatprep.subr.bf16.mxu0 0
        %1108 = vmatpush1.bf16.msra.mxu0 0
        %1109 = vmatprep.subr.bf16.mxu0 0
        %1110 = vmatpush1.bf16.msra.mxu0 0
        %1111 = vmatprep.subr.bf16.mxu0 0
        %1112 = vmatpush1.bf16.msra.mxu0 0
        %1113 = vmatprep.subr.bf16.mxu0 0
        %1114 = vmatpush1.bf16.msra.mxu0 0
        %1115 = vmatprep.mubr.bf16.mxu0 0
        %1116 = vmatmul.mubr.bf16.gmra.mrb[0].mxu0 %v1025
        %v1117 = vpop.f32.mrb[0].mxu0
        %v1118 = vadd.f32 %v997, %v1117
        %v1119 = vpop.f32.mrb[0].mxu0
        %v1120 = vadd.f32 %v997, %v1119
        %v1121 = vpop.f32.mrb[0].mxu0
        %v1122 = vadd.f32 %v1002, %v1121
        %v1123 = vpop.f32.mrb[0].mxu0
        %v1124 = vadd.f32 %v1002, %v1123
        %1125 = vmatprep.mubr.bf16.mxu0 0
        %1126 = vmatmul.mubr.bf16.gmra.mrb[0].mxu0 %v1028
        %v1127 = vpop.f32.mrb[0].mxu0
        %v1128 = vadd.f32 %v1007, %v1127
        %v1129 = vpop.f32.mrb[0].mxu0
        %v1130 = vadd.f32 %v1007, %v1129
        %v1131 = vpop.f32.mrb[0].mxu0
        %v1132 = vadd.f32 %v1012, %v1131
        %v1133 = vpop.f32.mrb[0].mxu0
        %v1134 = vadd.f32 %v1012, %v1133
        %1135 = vdwg.mxu0
        %vm1136 = vcmp.gt.f32.partialorder %v1065, 0.0
        %vm1137 = vcmp.gt.f32.partialorder %v1067, 0.0
        %vm1138 = vcmp.gt.f32.partialorder %v1118, 0.0
        %vm1139 = vcmp.gt.f32.partialorder %v1120, 0.0
        %vm1140 = vcmp.gt.f32.partialorder %v1069, 0.0
        %vm1141 = vcmp.gt.f32.partialorder %v1071, 0.0
        %vm1142 = vcmp.gt.f32.partialorder %v1122, 0.0
        %vm1143 = vcmp.gt.f32.partialorder %v1124, 0.0
        %vm1144 = vcmp.gt.f32.partialorder %v1075, 0.0
        %vm1145 = vcmp.gt.f32.partialorder %v1077, 0.0
        %vm1146 = vcmp.gt.f32.partialorder %v1128, 0.0
        %vm1147 = vcmp.gt.f32.partialorder %v1130, 0.0
        %vm1148 = vcmp.gt.f32.partialorder %v1079, 0.0
        %vm1149 = vcmp.gt.f32.partialorder %v1081, 0.0
        %vm1150 = vcmp.gt.f32.partialorder %v1132, 0.0
        %vm1151 = vcmp.gt.f32.partialorder %v1134, 0.0
        %v1152 = vmul.f32 %v1065, 0.2
        %v1153 = vmul.f32 %v1067, 0.2
        %v1154 = vmul.f32 %v1118, 0.2
        %v1155 = vmul.f32 %v1120, 0.2
        %v1156 = vmul.f32 %v1069, 0.2
        %v1157 = vmul.f32 %v1071, 0.2
        %v1158 = vmul.f32 %v1122, 0.2
        %v1159 = vmul.f32 %v1124, 0.2
        %v1160 = vmul.f32 %v1075, 0.2
        %v1161 = vmul.f32 %v1077, 0.2
        %v1162 = vmul.f32 %v1128, 0.2
        %v1163 = vmul.f32 %v1130, 0.2
        %v1164 = vmul.f32 %v1079, 0.2
        %v1165 = vmul.f32 %v1081, 0.2
        %v1166 = vmul.f32 %v1132, 0.2
        %v1167 = vmul.f32 %v1134, 0.2
        %v1168 = vsel %vm1136, %v1065, %v1152
        %v1169 = vsel %vm1137, %v1067, %v1153
        %v1170 = vsel %vm1138, %v1118, %v1154
        %v1171 = vsel %vm1139, %v1120, %v1155
        %v1172 = vsel %vm1140, %v1069, %v1156
        %v1173 = vsel %vm1141, %v1071, %v1157
        %v1174 = vsel %vm1142, %v1122, %v1158
        %v1175 = vsel %vm1143, %v1124, %v1159
        %v1176 = vsel %vm1144, %v1075, %v1160
        %v1177 = vsel %vm1145, %v1077, %v1161
        %v1178 = vsel %vm1146, %v1128, %v1162
        %v1179 = vsel %vm1147, %v1130, %v1163
        %v1180 = vsel %vm1148, %v1079, %v1164
        %v1181 = vsel %vm1149, %v1081, %v1165
        %v1182 = vsel %vm1150, %v1132, %v1166
        %v1183 = vsel %vm1151, %v1134, %v1167
        %v1184 = vadd.f32 %v752, %v1168
        %v1185 = vadd.f32 %v753, %v1169
        %v1186 = vadd.f32 %v754, %v1170
        %v1187 = vadd.f32 %v755, %v1171
        %v1188 = vadd.f32 %v756, %v1172
        %v1189 = vadd.f32 %v757, %v1173
        %v1190 = vadd.f32 %v758, %v1174
        %v1191 = vadd.f32 %v759, %v1175
        %v1192 = vadd.f32 %v760, %v1176
        %v1193 = vadd.f32 %v761, %v1177
        %v1194 = vadd.f32 %v762, %v1178
        %v1195 = vadd.f32 %v763, %v1179
        %v1196 = vadd.f32 %v764, %v1180
        %v1197 = vadd.f32 %v765, %v1181
        %v1198 = vadd.f32 %v766, %v1182
        %v1199 = vadd.f32 %v767, %v1183
        %s1200 = scalar_lea.vmem %s1, 32
        %v1201 = vld [vmem:[%s1200] sm:$0xf]
        %v1202 = vld [vmem:[%s1200 + $0x4] sm:$0xf]
        %v1203 = vld [vmem:[%s1200 + $0x8] sm:$0xf]
        %v1204 = vld [vmem:[%s1200 + $0xc] sm:$0xf]
        %v1205 = vpack.c.bf16 %v1188, %v1184
        %v1206 = vpack.c.bf16 %v1189, %v1185
        %v1207 = vpack.c.bf16 %v1190, %v1186
        %v1208 = vpack.c.bf16 %v1191, %v1187
        %v1209 = vpack.c.bf16 %v1196, %v1192
        %v1210 = vpack.c.bf16 %v1197, %v1193
        %v1211 = vpack.c.bf16 %v1198, %v1194
        %v1212 = vpack.c.bf16 %v1199, %v1195
        %s1213 = scalar_lea.vmem %s4, 128
        %v1214 = vld [vmem:[%s1213] sm:$0xff]
        %v1215 = vld [vmem:[%s1213 + $0x8] sm:$0xff]
        %v1216 = vld [vmem:[%s1213 + $0x10] sm:$0xff]
        %v1217 = vld [vmem:[%s1213 + $0x18] sm:$0xff]
        %1219 = vset.pattern.permute.xlu0 0
        %1220 = vperm.xlu0 %1219, %v1214
        %v1221 = vpop.permute.xlu0 %1220
        %1224 = vset.pattern.permute.xlu0 0
        %1225 = vperm.xlu0 %1224, %v1215
        %v1226 = vpop.permute.xlu0 %1225
        %1229 = vset.pattern.permute.xlu0 0
        %1230 = vperm.xlu0 %1229, %v1216
        %v1231 = vpop.permute.xlu0 %1230
        %1234 = vset.pattern.permute.xlu0 0
        %1235 = vperm.xlu0 %1234, %v1217
        %v1236 = vpop.permute.xlu0 %1235
        %v1242 = vunpack.c.l.b16 %v1201
        %v1243 = vunpack.c.l.b16 %v1202
        %v1244 = vunpack.c.l.b16 %v1203
        %v1245 = vunpack.c.l.b16 %v1204
        %v1246 = vpack.c.b16 %v1243, %v1242
        %v1247 = vpack.c.b16 %v1245, %v1244
        %v1249 = vsel %vm384, %v1246, 0
        %v1252 = vsel %vm384, %v1247, 0
        %1254 = vmatprep.subr.bf16.mxu0 %v1206
        %1255 = vmatpush1.bf16.msra.mxu0 %v1205
        %1256 = vmatprep.subr.bf16.mxu0 %v1210
        %1257 = vmatpush1.bf16.msra.mxu0 %v1209
        %1258 = vmatprep.subr.bf16.mxu0 0
        %1259 = vmatpush1.bf16.msra.mxu0 0
        %1260 = vmatprep.subr.bf16.mxu0 0
        %1261 = vmatpush1.bf16.msra.mxu0 0
        %1262 = vmatprep.subr.bf16.mxu0 0
        %1263 = vmatpush1.bf16.msra.mxu0 0
        %1264 = vmatprep.subr.bf16.mxu0 0
        %1265 = vmatpush1.bf16.msra.mxu0 0
        %1266 = vmatprep.subr.bf16.mxu0 0
        %1267 = vmatpush1.bf16.msra.mxu0 0
        %1268 = vmatprep.subr.bf16.mxu0 0
        %1269 = vmatpush1.bf16.msra.mxu0 0
        %1270 = vmatprep.subr.bf16.mxu0 0
        %1271 = vmatpush1.bf16.msra.mxu0 0
        %1272 = vmatprep.subr.bf16.mxu0 0
        %1273 = vmatpush1.bf16.msra.mxu0 0
        %1274 = vmatprep.subr.bf16.mxu0 0
        %1275 = vmatpush1.bf16.msra.mxu0 0
        %1276 = vmatprep.subr.bf16.mxu0 0
        %1277 = vmatpush1.bf16.msra.mxu0 0
        %1278 = vmatprep.subr.bf16.mxu0 0
        %1279 = vmatpush1.bf16.msra.mxu0 0
        %1280 = vmatprep.subr.bf16.mxu0 0
        %1281 = vmatpush1.bf16.msra.mxu0 0
        %1282 = vmatprep.subr.bf16.mxu0 0
        %1283 = vmatpush1.bf16.msra.mxu0 0
        %1284 = vmatprep.subr.bf16.mxu0 0
        %1285 = vmatpush1.bf16.msra.mxu0 0
        %1286 = vmatprep.mubr.bf16.mxu0 0
        %1287 = vmatmul.mubr.bf16.gmra.mrb[0].mxu0 %v1249
        %v1288 = vpop.f32.mrb[0].mxu0
        %v1289 = vadd.f32 %v1221, %v1288
        %v1290 = vpop.f32.mrb[0].mxu0
        %v1291 = vadd.f32 %v1221, %v1290
        %v1292 = vpop.f32.mrb[0].mxu0
        %v1293 = vadd.f32 %v1226, %v1292
        %v1294 = vpop.f32.mrb[0].mxu0
        %v1295 = vadd.f32 %v1226, %v1294
        %1296 = vmatprep.mubr.bf16.mxu0 0
        %1297 = vmatmul.mubr.bf16.gmra.mrb[0].mxu0 %v1252
        %v1298 = vpop.f32.mrb[0].mxu0
        %v1299 = vadd.f32 %v1231, %v1298
        %v1300 = vpop.f32.mrb[0].mxu0
        %v1301 = vadd.f32 %v1231, %v1300
        %v1302 = vpop.f32.mrb[0].mxu0
        %v1303 = vadd.f32 %v1236, %v1302
        %v1304 = vpop.f32.mrb[0].mxu0
        %v1305 = vadd.f32 %v1236, %v1304
        %1306 = vdwg.mxu0
        %1307 = vmatprep.subr.bf16.mxu0 %v1208
        %1308 = vmatpush1.bf16.msra.mxu0 %v1207
        %1309 = vmatprep.subr.bf16.mxu0 %v1212
        %1310 = vmatpush1.bf16.msra.mxu0 %v1211
        %1311 = vmatprep.subr.bf16.mxu0 0
        %1312 = vmatpush1.bf16.msra.mxu0 0
        %1313 = vmatprep.subr.bf16.mxu0 0
        %1314 = vmatpush1.bf16.msra.mxu0 0
        %1315 = vmatprep.subr.bf16.mxu0 0
        %1316 = vmatpush1.bf16.msra.mxu0 0
        %1317 = vmatprep.subr.bf16.mxu0 0
        %1318 = vmatpush1.bf16.msra.mxu0 0
        %1319 = vmatprep.subr.bf16.mxu0 0
        %1320 = vmatpush1.bf16.msra.mxu0 0
        %1321 = vmatprep.subr.bf16.mxu0 0
        %1322 = vmatpush1.bf16.msra.mxu0 0
        %1323 = vmatprep.subr.bf16.mxu0 0
        %1324 = vmatpush1.bf16.msra.mxu0 0
        %1325 = vmatprep.subr.bf16.mxu0 0
        %1326 = vmatpush1.bf16.msra.mxu0 0
        %1327 = vmatprep.subr.bf16.mxu0 0
        %1328 = vmatpush1.bf16.msra.mxu0 0
        %1329 = vmatprep.subr.bf16.mxu0 0
        %1330 = vmatpush1.bf16.msra.mxu0 0
        %1331 = vmatprep.subr.bf16.mxu0 0
        %1332 = vmatpush1.bf16.msra.mxu0 0
        %1333 = vmatprep.subr.bf16.mxu0 0
        %1334 = vmatpush1.bf16.msra.mxu0 0
        %1335 = vmatprep.subr.bf16.mxu0 0
        %1336 = vmatpush1.bf16.msra.mxu0 0
        %1337 = vmatprep.subr.bf16.mxu0 0
        %1338 = vmatpush1.bf16.msra.mxu0 0
        %1339 = vmatprep.mubr.bf16.mxu0 0
        %1340 = vmatmul.mubr.bf16.gmra.mrb[0].mxu0 %v1249
        %v1341 = vpop.f32.mrb[0].mxu0
        %v1342 = vadd.f32 %v1221, %v1341
        %v1343 = vpop.f32.mrb[0].mxu0
        %v1344 = vadd.f32 %v1221, %v1343
        %v1345 = vpop.f32.mrb[0].mxu0
        %v1346 = vadd.f32 %v1226, %v1345
        %v1347 = vpop.f32.mrb[0].mxu0
        %v1348 = vadd.f32 %v1226, %v1347
        %1349 = vmatprep.mubr.bf16.mxu0 0
        %1350 = vmatmul.mubr.bf16.gmra.mrb[0].mxu0 %v1252
        %v1351 = vpop.f32.mrb[0].mxu0
        %v1352 = vadd.f32 %v1231, %v1351
        %v1353 = vpop.f32.mrb[0].mxu0
        %v1354 = vadd.f32 %v1231, %v1353
        %v1355 = vpop.f32.mrb[0].mxu0
        %v1356 = vadd.f32 %v1236, %v1355
        %v1357 = vpop.f32.mrb[0].mxu0
        %v1358 = vadd.f32 %v1236, %v1357
        %1359 = vdwg.mxu0
        %vm1360 = vcmp.gt.f32.partialorder %v1289, 0.0
        %vm1361 = vcmp.gt.f32.partialorder %v1291, 0.0
        %vm1362 = vcmp.gt.f32.partialorder %v1342, 0.0
        %vm1363 = vcmp.gt.f32.partialorder %v1344, 0.0
        %vm1364 = vcmp.gt.f32.partialorder %v1293, 0.0
        %vm1365 = vcmp.gt.f32.partialorder %v1295, 0.0
        %vm1366 = vcmp.gt.f32.partialorder %v1346, 0.0
        %vm1367 = vcmp.gt.f32.partialorder %v1348, 0.0
        %vm1368 = vcmp.gt.f32.partialorder %v1299, 0.0
        %vm1369 = vcmp.gt.f32.partialorder %v1301, 0.0
        %vm1370 = vcmp.gt.f32.partialorder %v1352, 0.0
        %vm1371 = vcmp.gt.f32.partialorder %v1354, 0.0
        %vm1372 = vcmp.gt.f32.partialorder %v1303, 0.0
        %vm1373 = vcmp.gt.f32.partialorder %v1305, 0.0
        %vm1374 = vcmp.gt.f32.partialorder %v1356, 0.0
        %vm1375 = vcmp.gt.f32.partialorder %v1358, 0.0
        %v1376 = vmul.f32 %v1289, 0.2
        %v1377 = vmul.f32 %v1291, 0.2
        %v1378 = vmul.f32 %v1342, 0.2
        %v1379 = vmul.f32 %v1344, 0.2
        %v1380 = vmul.f32 %v1293, 0.2
        %v1381 = vmul.f32 %v1295, 0.2
        %v1382 = vmul.f32 %v1346, 0.2
        %v1383 = vmul.f32 %v1348, 0.2
        %v1384 = vmul.f32 %v1299, 0.2
        %v1385 = vmul.f32 %v1301, 0.2
        %v1386 = vmul.f32 %v1352, 0.2
        %v1387 = vmul.f32 %v1354, 0.2
        %v1388 = vmul.f32 %v1303, 0.2
        %v1389 = vmul.f32 %v1305, 0.2
        %v1390 = vmul.f32 %v1356, 0.2
        %v1391 = vmul.f32 %v1358, 0.2
        %v1392 = vsel %vm1360, %v1289, %v1376
        %v1393 = vsel %vm1361, %v1291, %v1377
        %v1394 = vsel %vm1362, %v1342, %v1378
        %v1395 = vsel %vm1363, %v1344, %v1379
        %v1396 = vsel %vm1364, %v1293, %v1380
        %v1397 = vsel %vm1365, %v1295, %v1381
        %v1398 = vsel %vm1366, %v1346, %v1382
        %v1399 = vsel %vm1367, %v1348, %v1383
        %v1400 = vsel %vm1368, %v1299, %v1384
        %v1401 = vsel %vm1369, %v1301, %v1385
        %v1402 = vsel %vm1370, %v1352, %v1386
        %v1403 = vsel %vm1371, %v1354, %v1387
        %v1404 = vsel %vm1372, %v1303, %v1388
        %v1405 = vsel %vm1373, %v1305, %v1389
        %v1406 = vsel %vm1374, %v1356, %v1390
        %v1407 = vsel %vm1375, %v1358, %v1391
        %s1408 = scalar_lea.vmem %s2, 32
        %v1409 = vld [vmem:[%s1408] sm:$0xf]
        %v1410 = vld [vmem:[%s1408 + $0x4] sm:$0xf]
        %v1411 = vld [vmem:[%s1408 + $0x8] sm:$0xf]
        %v1412 = vld [vmem:[%s1408 + $0xc] sm:$0xf]
        %v1413 = vpack.c.bf16 %v1396, %v1392
        %v1414 = vpack.c.bf16 %v1397, %v1393
        %v1415 = vpack.c.bf16 %v1398, %v1394
        %v1416 = vpack.c.bf16 %v1399, %v1395
        %v1417 = vpack.c.bf16 %v1404, %v1400
        %v1418 = vpack.c.bf16 %v1405, %v1401
        %v1419 = vpack.c.bf16 %v1406, %v1402
        %v1420 = vpack.c.bf16 %v1407, %v1403
        %s1421 = scalar_lea.vmem %s4, 160
        %v1422 = vld [vmem:[%s1421] sm:$0xff]
        %v1423 = vld [vmem:[%s1421 + $0x8] sm:$0xff]
        %v1424 = vld [vmem:[%s1421 + $0x10] sm:$0xff]
        %v1425 = vld [vmem:[%s1421 + $0x18] sm:$0xff]
        %1427 = vset.pattern.permute.xlu0 0
        %1428 = vperm.xlu0 %1427, %v1422
        %v1429 = vpop.permute.xlu0 %1428
        %1432 = vset.pattern.permute.xlu0 0
        %1433 = vperm.xlu0 %1432, %v1423
        %v1434 = vpop.permute.xlu0 %1433
        %1437 = vset.pattern.permute.xlu0 0
        %1438 = vperm.xlu0 %1437, %v1424
        %v1439 = vpop.permute.xlu0 %1438
        %1442 = vset.pattern.permute.xlu0 0
        %1443 = vperm.xlu0 %1442, %v1425
        %v1444 = vpop.permute.xlu0 %1443
        %v1450 = vunpack.c.l.b16 %v1409
        %v1451 = vunpack.c.l.b16 %v1410
        %v1452 = vunpack.c.l.b16 %v1411
        %v1453 = vunpack.c.l.b16 %v1412
        %v1454 = vpack.c.b16 %v1451, %v1450
        %v1455 = vpack.c.b16 %v1453, %v1452
        %v1457 = vsel %vm384, %v1454, 0
        %v1460 = vsel %vm384, %v1455, 0
        %1462 = vmatprep.subr.bf16.mxu0 %v1414
        %1463 = vmatpush1.bf16.msra.mxu0 %v1413
        %1464 = vmatprep.subr.bf16.mxu0 %v1418
        %1465 = vmatpush1.bf16.msra.mxu0 %v1417
        %1466 = vmatprep.subr.bf16.mxu0 0
        %1467 = vmatpush1.bf16.msra.mxu0 0
        %1468 = vmatprep.subr.bf16.mxu0 0
        %1469 = vmatpush1.bf16.msra.mxu0 0
        %1470 = vmatprep.subr.bf16.mxu0 0
        %1471 = vmatpush1.bf16.msra.mxu0 0
        %1472 = vmatprep.subr.bf16.mxu0 0
        %1473 = vmatpush1.bf16.msra.mxu0 0
        %1474 = vmatprep.subr.bf16.mxu0 0
        %1475 = vmatpush1.bf16.msra.mxu0 0
        %1476 = vmatprep.subr.bf16.mxu0 0
        %1477 = vmatpush1.bf16.msra.mxu0 0
        %1478 = vmatprep.subr.bf16.mxu0 0
        %1479 = vmatpush1.bf16.msra.mxu0 0
        %1480 = vmatprep.subr.bf16.mxu0 0
        %1481 = vmatpush1.bf16.msra.mxu0 0
        %1482 = vmatprep.subr.bf16.mxu0 0
        %1483 = vmatpush1.bf16.msra.mxu0 0
        %1484 = vmatprep.subr.bf16.mxu0 0
        %1485 = vmatpush1.bf16.msra.mxu0 0
        %1486 = vmatprep.subr.bf16.mxu0 0
        %1487 = vmatpush1.bf16.msra.mxu0 0
        %1488 = vmatprep.subr.bf16.mxu0 0
        %1489 = vmatpush1.bf16.msra.mxu0 0
        %1490 = vmatprep.subr.bf16.mxu0 0
        %1491 = vmatpush1.bf16.msra.mxu0 0
        %1492 = vmatprep.subr.bf16.mxu0 0
        %1493 = vmatpush1.bf16.msra.mxu0 0
        %1494 = vmatprep.mubr.bf16.mxu0 0
        %1495 = vmatmul.mubr.bf16.gmra.mrb[0].mxu0 %v1457
        %v1496 = vpop.f32.mrb[0].mxu0
        %v1497 = vadd.f32 %v1429, %v1496
        %v1498 = vpop.f32.mrb[0].mxu0
        %v1499 = vadd.f32 %v1429, %v1498
        %v1500 = vpop.f32.mrb[0].mxu0
        %v1501 = vadd.f32 %v1434, %v1500
        %v1502 = vpop.f32.mrb[0].mxu0
        %v1503 = vadd.f32 %v1434, %v1502
        %1504 = vmatprep.mubr.bf16.mxu0 0
        %1505 = vmatmul.mubr.bf16.gmra.mrb[0].mxu0 %v1460
        %v1506 = vpop.f32.mrb[0].mxu0
        %v1507 = vadd.f32 %v1439, %v1506
        %v1508 = vpop.f32.mrb[0].mxu0
        %v1509 = vadd.f32 %v1439, %v1508
        %v1510 = vpop.f32.mrb[0].mxu0
        %v1511 = vadd.f32 %v1444, %v1510
        %v1512 = vpop.f32.mrb[0].mxu0
        %v1513 = vadd.f32 %v1444, %v1512
        %1514 = vdwg.mxu0
        %1515 = vmatprep.subr.bf16.mxu0 %v1416
        %1516 = vmatpush1.bf16.msra.mxu0 %v1415
        %1517 = vmatprep.subr.bf16.mxu0 %v1420
        %1518 = vmatpush1.bf16.msra.mxu0 %v1419
        %1519 = vmatprep.subr.bf16.mxu0 0
        %1520 = vmatpush1.bf16.msra.mxu0 0
        %1521 = vmatprep.subr.bf16.mxu0 0
        %1522 = vmatpush1.bf16.msra.mxu0 0
        %1523 = vmatprep.subr.bf16.mxu0 0
        %1524 = vmatpush1.bf16.msra.mxu0 0
        %1525 = vmatprep.subr.bf16.mxu0 0
        %1526 = vmatpush1.bf16.msra.mxu0 0
        %1527 = vmatprep.subr.bf16.mxu0 0
        %1528 = vmatpush1.bf16.msra.mxu0 0
        %1529 = vmatprep.subr.bf16.mxu0 0
        %1530 = vmatpush1.bf16.msra.mxu0 0
        %1531 = vmatprep.subr.bf16.mxu0 0
        %1532 = vmatpush1.bf16.msra.mxu0 0
        %1533 = vmatprep.subr.bf16.mxu0 0
        %1534 = vmatpush1.bf16.msra.mxu0 0
        %1535 = vmatprep.subr.bf16.mxu0 0
        %1536 = vmatpush1.bf16.msra.mxu0 0
        %1537 = vmatprep.subr.bf16.mxu0 0
        %1538 = vmatpush1.bf16.msra.mxu0 0
        %1539 = vmatprep.subr.bf16.mxu0 0
        %1540 = vmatpush1.bf16.msra.mxu0 0
        %1541 = vmatprep.subr.bf16.mxu0 0
        %1542 = vmatpush1.bf16.msra.mxu0 0
        %1543 = vmatprep.subr.bf16.mxu0 0
        %1544 = vmatpush1.bf16.msra.mxu0 0
        %1545 = vmatprep.subr.bf16.mxu0 0
        %1546 = vmatpush1.bf16.msra.mxu0 0
        %1547 = vmatprep.mubr.bf16.mxu0 0
        %1548 = vmatmul.mubr.bf16.gmra.mrb[0].mxu0 %v1457
        %v1549 = vpop.f32.mrb[0].mxu0
        %v1550 = vadd.f32 %v1429, %v1549
        %v1551 = vpop.f32.mrb[0].mxu0
        %v1552 = vadd.f32 %v1429, %v1551
        %v1553 = vpop.f32.mrb[0].mxu0
        %v1554 = vadd.f32 %v1434, %v1553
        %v1555 = vpop.f32.mrb[0].mxu0
        %v1556 = vadd.f32 %v1434, %v1555
        %1557 = vmatprep.mubr.bf16.mxu0 0
        %1558 = vmatmul.mubr.bf16.gmra.mrb[0].mxu0 %v1460
        %v1559 = vpop.f32.mrb[0].mxu0
        %v1560 = vadd.f32 %v1439, %v1559
        %v1561 = vpop.f32.mrb[0].mxu0
        %v1562 = vadd.f32 %v1439, %v1561
        %v1563 = vpop.f32.mrb[0].mxu0
        %v1564 = vadd.f32 %v1444, %v1563
        %v1565 = vpop.f32.mrb[0].mxu0
        %v1566 = vadd.f32 %v1444, %v1565
        %1567 = vdwg.mxu0
        %vm1568 = vcmp.gt.f32.partialorder %v1497, 0.0
        %vm1569 = vcmp.gt.f32.partialorder %v1499, 0.0
        %vm1570 = vcmp.gt.f32.partialorder %v1550, 0.0
        %vm1571 = vcmp.gt.f32.partialorder %v1552, 0.0
        %vm1572 = vcmp.gt.f32.partialorder %v1501, 0.0
        %vm1573 = vcmp.gt.f32.partialorder %v1503, 0.0
        %vm1574 = vcmp.gt.f32.partialorder %v1554, 0.0
        %vm1575 = vcmp.gt.f32.partialorder %v1556, 0.0
        %vm1576 = vcmp.gt.f32.partialorder %v1507, 0.0
        %vm1577 = vcmp.gt.f32.partialorder %v1509, 0.0
        %vm1578 = vcmp.gt.f32.partialorder %v1560, 0.0
        %vm1579 = vcmp.gt.f32.partialorder %v1562, 0.0
        %vm1580 = vcmp.gt.f32.partialorder %v1511, 0.0
        %vm1581 = vcmp.gt.f32.partialorder %v1513, 0.0
        %vm1582 = vcmp.gt.f32.partialorder %v1564, 0.0
        %vm1583 = vcmp.gt.f32.partialorder %v1566, 0.0
        %v1584 = vmul.f32 %v1497, 0.2
        %v1585 = vmul.f32 %v1499, 0.2
        %v1586 = vmul.f32 %v1550, 0.2
        %v1587 = vmul.f32 %v1552, 0.2
        %v1588 = vmul.f32 %v1501, 0.2
        %v1589 = vmul.f32 %v1503, 0.2
        %v1590 = vmul.f32 %v1554, 0.2
        %v1591 = vmul.f32 %v1556, 0.2
        %v1592 = vmul.f32 %v1507, 0.2
        %v1593 = vmul.f32 %v1509, 0.2
        %v1594 = vmul.f32 %v1560, 0.2
        %v1595 = vmul.f32 %v1562, 0.2
        %v1596 = vmul.f32 %v1511, 0.2
        %v1597 = vmul.f32 %v1513, 0.2
        %v1598 = vmul.f32 %v1564, 0.2
        %v1599 = vmul.f32 %v1566, 0.2
        %v1600 = vsel %vm1568, %v1497, %v1584
        %v1601 = vsel %vm1569, %v1499, %v1585
        %v1602 = vsel %vm1570, %v1550, %v1586
        %v1603 = vsel %vm1571, %v1552, %v1587
        %v1604 = vsel %vm1572, %v1501, %v1588
        %v1605 = vsel %vm1573, %v1503, %v1589
        %v1606 = vsel %vm1574, %v1554, %v1590
        %v1607 = vsel %vm1575, %v1556, %v1591
        %v1608 = vsel %vm1576, %v1507, %v1592
        %v1609 = vsel %vm1577, %v1509, %v1593
        %v1610 = vsel %vm1578, %v1560, %v1594
        %v1611 = vsel %vm1579, %v1562, %v1595
        %v1612 = vsel %vm1580, %v1511, %v1596
        %v1613 = vsel %vm1581, %v1513, %v1597
        %v1614 = vsel %vm1582, %v1564, %v1598
        %v1615 = vsel %vm1583, %v1566, %v1599
        %v1616 = vadd.f32 %v1184, %v1600
        %v1617 = vadd.f32 %v1185, %v1601
        %v1618 = vadd.f32 %v1186, %v1602
        %v1619 = vadd.f32 %v1187, %v1603
        %v1620 = vadd.f32 %v1188, %v1604
        %v1621 = vadd.f32 %v1189, %v1605
        %v1622 = vadd.f32 %v1190, %v1606
        %v1623 = vadd.f32 %v1191, %v1607
        %v1624 = vadd.f32 %v1192, %v1608
        %v1625 = vadd.f32 %v1193, %v1609
        %v1626 = vadd.f32 %v1194, %v1610
        %v1627 = vadd.f32 %v1195, %v1611
        %v1628 = vadd.f32 %v1196, %v1612
        %v1629 = vadd.f32 %v1197, %v1613
        %v1630 = vadd.f32 %v1198, %v1614
        %v1631 = vadd.f32 %v1199, %v1615
        %v1632 = vld [vmem:[%s3] sm:$0xf]
        %v1633 = vld [vmem:[%s3 + $0x4] sm:$0xf]
        %v1634 = vld [vmem:[%s3 + $0x8] sm:$0xf]
        %v1635 = vld [vmem:[%s3 + $0xc] sm:$0xf]
        %v1636 = vpack.c.bf16 %v1620, %v1616
        %v1637 = vpack.c.bf16 %v1621, %v1617
        %v1638 = vpack.c.bf16 %v1622, %v1618
        %v1639 = vpack.c.bf16 %v1623, %v1619
        %v1640 = vpack.c.bf16 %v1628, %v1624
        %v1641 = vpack.c.bf16 %v1629, %v1625
        %v1642 = vpack.c.bf16 %v1630, %v1626
        %v1643 = vpack.c.bf16 %v1631, %v1627
        %v1644 = vld [vmem:[%s5] sm:$0xff]
        %v1645 = vld [vmem:[%s5 + $0x8] sm:$0xff]
        %v1646 = vld [vmem:[%s5 + $0x10] sm:$0xff]
        %v1647 = vld [vmem:[%s5 + $0x18] sm:$0xff]
        %1649 = vset.pattern.permute.xlu0 0
        %1650 = vperm.xlu0 %1649, %v1644
        %v1651 = vpop.permute.xlu0 %1650
        %1654 = vset.pattern.permute.xlu0 0
        %1655 = vperm.xlu0 %1654, %v1645
        %v1656 = vpop.permute.xlu0 %1655
        %1659 = vset.pattern.permute.xlu0 0
        %1660 = vperm.xlu0 %1659, %v1646
        %v1661 = vpop.permute.xlu0 %1660
        %1664 = vset.pattern.permute.xlu0 0
        %1665 = vperm.xlu0 %1664, %v1647
        %v1666 = vpop.permute.xlu0 %1665
        %v1672 = vunpack.c.l.b16 %v1632
        %v1673 = vunpack.c.l.b16 %v1633
        %v1674 = vunpack.c.l.b16 %v1634
        %v1675 = vunpack.c.l.b16 %v1635
        %v1676 = vpack.c.b16 %v1673, %v1672
        %v1677 = vpack.c.b16 %v1675, %v1674
        %v1679 = vsel %vm384, %v1676, 0
        %v1682 = vsel %vm384, %v1677, 0
        %1684 = vmatprep.subr.bf16.mxu0 %v1637
        %1685 = vmatpush1.bf16.msra.mxu0 %v1636
        %1686 = vmatprep.subr.bf16.mxu0 %v1641
        %1687 = vmatpush1.bf16.msra.mxu0 %v1640
        %1688 = vmatprep.subr.bf16.mxu0 0
        %1689 = vmatpush1.bf16.msra.mxu0 0
        %1690 = vmatprep.subr.bf16.mxu0 0
        %1691 = vmatpush1.bf16.msra.mxu0 0
        %1692 = vmatprep.subr.bf16.mxu0 0
        %1693 = vmatpush1.bf16.msra.mxu0 0
        %1694 = vmatprep.subr.bf16.mxu0 0
        %1695 = vmatpush1.bf16.msra.mxu0 0
        %1696 = vmatprep.subr.bf16.mxu0 0
        %1697 = vmatpush1.bf16.msra.mxu0 0
        %1698 = vmatprep.subr.bf16.mxu0 0
        %1699 = vmatpush1.bf16.msra.mxu0 0
        %1700 = vmatprep.subr.bf16.mxu0 0
        %1701 = vmatpush1.bf16.msra.mxu0 0
        %1702 = vmatprep.subr.bf16.mxu0 0
        %1703 = vmatpush1.bf16.msra.mxu0 0
        %1704 = vmatprep.subr.bf16.mxu0 0
        %1705 = vmatpush1.bf16.msra.mxu0 0
        %1706 = vmatprep.subr.bf16.mxu0 0
        %1707 = vmatpush1.bf16.msra.mxu0 0
        %1708 = vmatprep.subr.bf16.mxu0 0
        %1709 = vmatpush1.bf16.msra.mxu0 0
        %1710 = vmatprep.subr.bf16.mxu0 0
        %1711 = vmatpush1.bf16.msra.mxu0 0
        %1712 = vmatprep.subr.bf16.mxu0 0
        %1713 = vmatpush1.bf16.msra.mxu0 0
        %1714 = vmatprep.subr.bf16.mxu0 0
        %1715 = vmatpush1.bf16.msra.mxu0 0
        %1716 = vmatprep.mubr.bf16.mxu0 0
        %1717 = vmatmul.mubr.bf16.gmra.mrb[0].mxu0 %v1679
        %v1718 = vpop.f32.mrb[0].mxu0
        %v1719 = vadd.f32 %v1651, %v1718
        %v1720 = vpop.f32.mrb[0].mxu0
        %v1721 = vadd.f32 %v1651, %v1720
        %v1722 = vpop.f32.mrb[0].mxu0
        %v1723 = vadd.f32 %v1656, %v1722
        %v1724 = vpop.f32.mrb[0].mxu0
        %v1725 = vadd.f32 %v1656, %v1724
        %1726 = vmatprep.mubr.bf16.mxu0 0
        %1727 = vmatmul.mubr.bf16.gmra.mrb[0].mxu0 %v1682
        %v1728 = vpop.f32.mrb[0].mxu0
        %v1729 = vadd.f32 %v1661, %v1728
        %v1730 = vpop.f32.mrb[0].mxu0
        %v1731 = vadd.f32 %v1661, %v1730
        %v1732 = vpop.f32.mrb[0].mxu0
        %v1733 = vadd.f32 %v1666, %v1732
        %v1734 = vpop.f32.mrb[0].mxu0
        %v1735 = vadd.f32 %v1666, %v1734
        %1736 = vdwg.mxu0
        %1737 = vmatprep.subr.bf16.mxu0 %v1639
        %1738 = vmatpush1.bf16.msra.mxu0 %v1638
        %1739 = vmatprep.subr.bf16.mxu0 %v1643
        %1740 = vmatpush1.bf16.msra.mxu0 %v1642
        %1741 = vmatprep.subr.bf16.mxu0 0
        %1742 = vmatpush1.bf16.msra.mxu0 0
        %1743 = vmatprep.subr.bf16.mxu0 0
        %1744 = vmatpush1.bf16.msra.mxu0 0
        %1745 = vmatprep.subr.bf16.mxu0 0
        %1746 = vmatpush1.bf16.msra.mxu0 0
        %1747 = vmatprep.subr.bf16.mxu0 0
        %1748 = vmatpush1.bf16.msra.mxu0 0
        %1749 = vmatprep.subr.bf16.mxu0 0
        %1750 = vmatpush1.bf16.msra.mxu0 0
        %1751 = vmatprep.subr.bf16.mxu0 0
        %1752 = vmatpush1.bf16.msra.mxu0 0
        %1753 = vmatprep.subr.bf16.mxu0 0
        %1754 = vmatpush1.bf16.msra.mxu0 0
        %1755 = vmatprep.subr.bf16.mxu0 0
        %1756 = vmatpush1.bf16.msra.mxu0 0
        %1757 = vmatprep.subr.bf16.mxu0 0
        %1758 = vmatpush1.bf16.msra.mxu0 0
        %1759 = vmatprep.subr.bf16.mxu0 0
        %1760 = vmatpush1.bf16.msra.mxu0 0
        %1761 = vmatprep.subr.bf16.mxu0 0
        %1762 = vmatpush1.bf16.msra.mxu0 0
        %1763 = vmatprep.subr.bf16.mxu0 0
        %1764 = vmatpush1.bf16.msra.mxu0 0
        %1765 = vmatprep.subr.bf16.mxu0 0
        %1766 = vmatpush1.bf16.msra.mxu0 0
        %1767 = vmatprep.subr.bf16.mxu0 0
        %1768 = vmatpush1.bf16.msra.mxu0 0
        %1769 = vmatprep.mubr.bf16.mxu0 0
        %1770 = vmatmul.mubr.bf16.gmra.mrb[0].mxu0 %v1679
        %v1771 = vpop.f32.mrb[0].mxu0
        %v1772 = vadd.f32 %v1651, %v1771
        %v1773 = vpop.f32.mrb[0].mxu0
        %v1774 = vadd.f32 %v1651, %v1773
        %v1775 = vpop.f32.mrb[0].mxu0
        %v1776 = vadd.f32 %v1656, %v1775
        %v1777 = vpop.f32.mrb[0].mxu0
        %v1778 = vadd.f32 %v1656, %v1777
        %1779 = vmatprep.mubr.bf16.mxu0 0
        %1780 = vmatmul.mubr.bf16.gmra.mrb[0].mxu0 %v1682
        %v1781 = vpop.f32.mrb[0].mxu0
        %v1782 = vadd.f32 %v1661, %v1781
        %v1783 = vpop.f32.mrb[0].mxu0
        %v1784 = vadd.f32 %v1661, %v1783
        %v1785 = vpop.f32.mrb[0].mxu0
        %v1786 = vadd.f32 %v1666, %v1785
        %v1787 = vpop.f32.mrb[0].mxu0
        %v1788 = vadd.f32 %v1666, %v1787
        %1789 = vdwg.mxu0
        %v1790 = vpack.c.bf16 %v1723, %v1719
        %v1791 = vpack.c.bf16 %v1725, %v1721
        %v1792 = vpack.c.bf16 %v1776, %v1772
        %v1793 = vpack.c.bf16 %v1778, %v1774
        %v1794 = vpack.c.bf16 %v1733, %v1729
        %v1795 = vpack.c.bf16 %v1735, %v1731
        %v1796 = vpack.c.bf16 %v1786, %v1782
        %v1797 = vpack.c.bf16 %v1788, %v1784
        %v1806 = vunpack.c.l.b16 %v1790
        %v1807 = vunpack.c.l.b16 %v1791
        %v1808 = vunpack.c.l.b16 %v1792
        %v1809 = vunpack.c.l.b16 %v1793
        %v1810 = vunpack.c.h.b16 %v1790
        %v1811 = vunpack.c.h.b16 %v1791
        %v1812 = vunpack.c.h.b16 %v1792
        %v1813 = vunpack.c.h.b16 %v1793
        %v1814 = vunpack.c.l.b16 %v1794
        %v1815 = vunpack.c.l.b16 %v1795
        %v1816 = vunpack.c.l.b16 %v1796
        %v1817 = vunpack.c.l.b16 %v1797
        %v1818 = vunpack.c.h.b16 %v1794
        %v1819 = vunpack.c.h.b16 %v1795
        %v1820 = vunpack.c.h.b16 %v1796
        %v1821 = vunpack.c.h.b16 %v1797
        %v1822 = vpack.c.b16 %v1807, %v1806
        %v1823 = vpack.c.b16 %v1809, %v1808
        %v1824 = vpack.c.b16 %v1811, %v1810
        %v1825 = vpack.c.b16 %v1813, %v1812
        %v1826 = vpack.c.b16 %v1815, %v1814
        %v1827 = vpack.c.b16 %v1817, %v1816
        %v1828 = vpack.c.b16 %v1819, %v1818
        %v1829 = vpack.c.b16 %v1821, %v1820
        %1838 = vst [vmem:[%s269] sm:$0xff] %v1822
        %1839 = vst [vmem:[%s269 + $0x8] sm:$0xff] %v1823
        %1840 = vst [vmem:[%s269 + $0x10] sm:$0xff] %v1824
        %1841 = vst [vmem:[%s269 + $0x18] sm:$0xff] %v1825
        %1842 = vst [vmem:[%s269 + $0x20] sm:$0xff] %v1826
        %1843 = vst [vmem:[%s269 + $0x28] sm:$0xff] %v1827
        %1844 = vst [vmem:[%s269 + $0x30] sm:$0xff] %v1828
        %1845 = vst [vmem:[%s269 + $0x38] sm:$0xff] %v1829
        %s1846 = sand.u32 %s175, 1
        %s1847 = scalar_lea.sflag [#allocation3], %s1846
        %s1848 = sand.u32 %s175, 1
        %s1849 = smul.addr %s1848, 64
        %s1850 = scalar_lea.vmem [#allocation2], %s1849
        // Predicated region
        $region45: #{encoder2d_forward.1} parent=43 // pred_check
          %p1851 = pneg %p185
        $region46: #{encoder2d_forward.1} parent=43 // pred_check_branch
          %1853 = sbr.rel (%p1851) target = $region48
        $region47: #{encoder2d_forward.1} parent=43 // pred_region
          %s1854 = smul.u32 4, %s25
          %s1856 = ssub.s32 1024, 1024
          %1857 = vsyncadd %s1847, %s1856
          %s1858 = smul.addr %s24, 16
          %s1859 = sadd.s32 %s1854, %s1858
          %s1860 = smul.addr %s1859, 64
          %s1861 = scalar_lea.hbm %s6, %s1860
          %s1862 = sshll.u32 %s1850, 4
          %s1863 = int_to_ptr.vmem [resolvable:$true] %s1862
          %1868 = dma.vmem_to_hbm [thread:$0]  %s1863, 1024, %s1861, %s1847, 256, 256, 16
        $region48: #{encoder2d_forward.1} parent=43 // pred_fallthru
          _
      $region44: #{encoder2d_forward.1} parent=5 // pred_fallthru
        _
      %p1869 = scmp.le.s32.totalorder 2, %s15
      // Predicated region
      $region49: #{encoder2d_forward.1} parent=5 // pred_check
        %p1870 = pneg %p1869
      $region50: #{encoder2d_forward.1} parent=5 // pred_check_branch
        %1872 = sbr.rel (%p1870) target = $region52
      $region51: #{encoder2d_forward.1} parent=5 // pred_region
        %s1873 = ssub.s32 %s15, 2
        // Predicated region
        $region53: #{encoder2d_forward.1} parent=51 // pred_check
          %p1874 = pneg %p191
        $region54: #{encoder2d_forward.1} parent=51 // pred_check_branch
          %1876 = sbr.rel (%p1874) target = $region56
        $region55: #{encoder2d_forward.1} parent=51 // pred_region
          %s1877 = sand.u32 %s176, 1
          %s1878 = scalar_lea.sflag [#allocation3], %s1877
          %s1879 = sand.u32 %s176, 1
          %s1880 = smul.addr %s1879, 64
          %s1881 = scalar_lea.vmem [#allocation2], %s1880
          %1882 = dma.done %s1878, 1024
        $region56: #{encoder2d_forward.1} parent=51 // pred_fallthru
          _
      $region52: #{encoder2d_forward.1} parent=5 // pred_fallthru
        _
    $region6: #{encoder2d_forward.1} parent=1 // loop_footer
      %s19 = sadd.s32 1, %s15
    $region7: #{encoder2d_forward.1} parent=1 // loop_footer_branch
      %14 = sbr.rel target = $region3
    $region8: #{encoder2d_forward.1} parent=1 // loop_exit
      _
    %1883 = vsyncpa [#allocation3], 1
    %s1884 = scalar_lea.sflag [#allocation3], 1
    %1885 = vsyncpa %s1884, 1

</llo_original>
